<compile_context>
chip_gen: v6e
topology: v6e:2x2x1
jax: 0.10.0
libtpu: 0.0.40
codegen_flags: <defaults>
</compile_context>

<pallas_src>
import math
import functools

import jax
import jax.numpy as jnp
import numpy as np
from jax.experimental import pallas as pl
from jax.experimental.pallas import tpu as pltpu

F32_EPS = float(jnp.finfo(jnp.float32).eps)  # F.rms_norm default eps for float32

# 256-multiple padding feeds the full 2x256^2 MXU on v6e/v7x (use 128 on v5e).
LANE_MULT = 256


def _round_up(x, m):
    return (x + m - 1) // m * m


# ----------------------------------------------------------------------------
# Fused kernel: RMSNorm + 6-way projection + RoPE + TPA attention + residual
#               + RMSNorm + SiLU-MLP + residual        (one grid step per batch)
# ----------------------------------------------------------------------------

def _t6_block_kernel(x_ref, w_ref, cs_ref, w12_ref, wp_ref, o_ref, *,
                     n_heads, q_rank, rank, head_dim, hidden_pad):
    S = x_ref.shape[1]
    H, Rq, R, Hd = n_heads, q_rank, rank, head_dim
    half = Hd // 2

    x = x_ref[0].astype(jnp.float32)                               # (S, D)

    # ---- RMSNorm #1 + all six projections as one lane-dense bf16 MXU matmul.
    xn = x * jax.lax.rsqrt(jnp.mean(x * x, axis=-1, keepdims=True) + F32_EPS)
    proj = jnp.dot(xn.astype(jnp.bfloat16), w_ref[...],
                   preferred_element_type=jnp.float32)             # (S, Npad) f32

    # Column offsets of the packed projection (A scales folded into weights).
    off_aq = 0
    off_ak = off_aq + H * Rq
    off_av = off_ak + H * R
    off_bq = off_av + H * R
    off_bk = off_bq + Rq * Hd
    off_bv = off_bk + R * Hd

    cos = cs_ref[:, :half]                                         # (S, half)
    sin = cs_ref[:, half:]

    # Rank-factor slabs: one static 2-D slice per rank, hoisted out of the head loop.
    bq = [proj[:, off_bq + r * Hd: off_bq + (r + 1) * Hd] for r in range(Rq)]
    bk = [proj[:, off_bk + r * Hd: off_bk + (r + 1) * Hd] for r in range(R)]
    bv = [proj[:, off_bv + r * Hd: off_bv + (r + 1) * Hd] for r in range(R)]

    # Causal mask generated in-kernel (no (S, S) HBM traffic).
    row = jax.lax.broadcasted_iota(jnp.int32, (S, S), 0)
    col = jax.lax.broadcasted_iota(jnp.int32, (S, S), 1)
    bias = jnp.where(col <= row, 0.0, -1e9)

    def contract(off, factors, h, r_count):
        # TPA rank contraction on the VPU: r_count broadcast FMAs of
        # (S,1) * (S,Hd).  (rank=2 / q_rank=12 would waste a 128/256-wide MXU.)
        c0 = off + h * r_count
        acc = proj[:, c0:c0 + 1] * factors[0]
        for r in range(1, r_count):
            acc = acc + proj[:, c0 + r: c0 + r + 1] * factors[r]
        return acc                                                 # (S, Hd)

    def rope(t):
        # Rotate-half RoPE; equivalent to the interleaved form because the
        # head-dim columns of W_B_q / W_B_k were permuted host-side.
        t1, t2 = t[:, :half], t[:, half:]
        return jnp.concatenate([t1 * cos - t2 * sin,
                                t1 * sin + t2 * cos], axis=-1)

    heads = []
    for h in range(H):
        q_h = rope(contract(off_aq, bq, h, Rq))                    # (S, Hd)
        k_h = rope(contract(off_ak, bk, h, R))
        v_h = contract(off_av, bv, h, R)

        # 1/sqrt(head_dim), 1/q_rank, 1/rank already folded into W_A_*.
        s_h = jnp.einsum('sd,td->st', q_h, k_h,
                         preferred_element_type=jnp.float32) + bias
        m = jnp.max(s_h, axis=-1, keepdims=True)
        p = jnp.exp(s_h - m)
        # EUP approx reciprocal for the softmax denominator (documented approx).
        p = p * pl.reciprocal(jnp.sum(p, axis=-1, keepdims=True), approx=True)
        heads.append(jnp.dot(p, v_h, preferred_element_type=jnp.float32))

    attn = jnp.concatenate(heads, axis=-1)                         # (S, D)
    h_res = x + attn

    # ---- RMSNorm #2 + fused SiLU MLP (fc1|fc2 concatenated, zero-padded -> exact).
    hn = h_res * jax.lax.rsqrt(
        jnp.mean(h_res * h_res, axis=-1, keepdims=True) + F32_EPS)
    h12 = jnp.dot(hn.astype(jnp.bfloat16), w12_ref[...],
                  preferred_element_type=jnp.float32)              # (S, 2*hidden_pad)
    h1 = h12[:, :hidden_pad]
    h2 = h12[:, hidden_pad:]
    g = h1 * (1.0 / (1.0 + jnp.exp(-h1))) * h2                     # exact silu gate
    ff = jnp.dot(g.astype(jnp.bfloat16), wp_ref[...],
                 preferred_element_type=jnp.float32)

    o_ref[0] = (h_res + ff).astype(o_ref.dtype)


# ----------------------------------------------------------------------------
# T6Block forward (host glue: weight packing only — done once per call here,
# once at load time in a real deployment)
# ----------------------------------------------------------------------------

def t6_block_forward(params, x, cos, sin, *, n_heads, head_dim, q_rank, rank):
    B, S, D = x.shape
    H, Rq, R, Hd = n_heads, q_rank, rank, head_dim

    # Fold interleaved->rotate-half head-dim permutation into W_B_q / W_B_k.
    perm = np.concatenate([np.arange(0, Hd, 2), np.arange(1, Hd, 2)])

    def permute_head_dim(w, r):
        return w.reshape(D, r, Hd)[:, :, perm].reshape(D, r * Hd)

    # Fold 1/q_rank, 1/rank and 1/sqrt(head_dim) into the A-factor weights.
    q_scale = 1.0 / (Rq * math.sqrt(Hd))
    kv_scale = 1.0 / R

    w_parts = [params['W_A_q'] * q_scale,
               params['W_A_k'] * kv_scale,
               params['W_A_v'] * kv_scale,
               permute_head_dim(params['W_B_q'], Rq),
               permute_head_dim(params['W_B_k'], R),
               params['W_B_v']]
    n_proj = H * Rq + 2 * H * R + Rq * Hd + 2 * R * Hd
    n_pad = _round_up(n_proj, LANE_MULT)
    w_cat = jnp.concatenate(w_parts, axis=1)
    w_cat = jnp.pad(w_cat, ((0, 0), (0, n_pad - n_proj))).astype(jnp.bfloat16)

    hidden = params['c_fc1'].shape[1]
    hidden_pad = _round_up(hidden, LANE_MULT)
    w12 = jnp.zeros((D, 2 * hidden_pad), jnp.float32)
    w12 = w12.at[:, :hidden].set(params['c_fc1'])
    w12 = w12.at[:, hidden_pad:hidden_pad + hidden].set(params['c_fc2'])
    w12 = w12.astype(jnp.bfloat16)
    wp = (jnp.zeros((hidden_pad, D), jnp.float32)
          .at[:hidden].set(params['c_proj']).astype(jnp.bfloat16))

    cs = jnp.concatenate([cos, sin], axis=-1)                      # (S, Hd)

    kernel = functools.partial(_t6_block_kernel, n_heads=H, q_rank=Rq, rank=R,
                               head_dim=Hd, hidden_pad=hidden_pad)

    return pl.pallas_call(
        kernel,
        out_shape=jax.ShapeDtypeStruct((B, S, D), x.dtype),
        grid=(B,),
        in_specs=[
            pl.BlockSpec((1, S, D), lambda b: (b, 0, 0)),
            pl.BlockSpec((D, n_pad), lambda b: (0, 0)),
            pl.BlockSpec((S, Hd), lambda b: (0, 0)),
            pl.BlockSpec((D, 2 * hidden_pad), lambda b: (0, 0)),
            pl.BlockSpec((hidden_pad, D), lambda b: (0, 0)),
        ],
        out_specs=pl.BlockSpec((1, S, D), lambda b: (b, 0, 0)),
        compiler_params=pltpu.CompilerParams(
            dimension_semantics=("parallel",)),
    )(x, w_cat, cs, w12, wp)


# ----------------------------------------------------------------------------
# Pure-JAX reference (mirrors the PyTorch math, interleaved RoPE, original weights)
# ----------------------------------------------------------------------------

def t6_block_ref(params, x, cos, sin, mask, *, n_heads, head_dim, q_rank, rank):
    B, S, D = x.shape

    def rms(v):
        return v * jax.lax.rsqrt(jnp.mean(v * v, axis=-1, keepdims=True) + F32_EPS)

    def rope(v):
        b, s, r, hd = v.shape
        vr = v.reshape(b, s, r, hd // 2, 2)
        ve, vo = vr[..., 0], vr[..., 1]
        c, si = cos[None, :, None, :], sin[None, :, None, :]
        return jnp.stack([ve * c - vo * si, ve * si + vo * c], axis=-1
                         ).reshape(b, s, r, hd)

    xn = rms(x)
    A_q = (xn @ params['W_A_q']).reshape(B, S, n_heads, q_rank)
    A_k = (xn @ params['W_A_k']).reshape(B, S, n_heads, rank)
    A_v = (xn @ params['W_A_v']).reshape(B, S, n_heads, rank)
    B_q = rope((xn @ params['W_B_q']).reshape(B, S, q_rank, head_dim))
    B_k = rope((xn @ params['W_B_k']).reshape(B, S, rank, head_dim))
    B_v = (xn @ params['W_B_v']).reshape(B, S, rank, head_dim)

    q = jnp.einsum('bshr,bsrd->bshd', A_q, B_q) / q_rank
    k = jnp.einsum('bshr,bsrd->bshd', A_k, B_k) / rank
    v = jnp.einsum('bshr,bsrd->bshd', A_v, B_v) / rank

    scores = jnp.einsum('bshd,bthd->bhst', q, k) / math.sqrt(head_dim)
    scores = scores + mask[None, None, :, :]
    p = jax.nn.softmax(scores.astype(jnp.float32), axis=-1)
    attn = jnp.einsum('bhst,bthd->bshd', p, v).reshape(B, S, D)
    h = x + attn

    hn = rms(h)
    h1 = hn @ params['c_fc1']
    h2 = hn @ params['c_fc2']
    ff = (h1 * jax.nn.sigmoid(h1) * h2) @ params['c_proj']
    return h + ff


# ----------------------------------------------------------------------------
# main
# ----------------------------------------------------------------------------

if __name__ == "__main__":
    # Small shapes consistent with ModelArgs: dim=32, n_heads=4 -> head_dim=8,
    # q_rank=12, rank=2, batch=2, seq=8, rope_theta=500000, start_pos=0.
    B, S, D = 2, 8, 32
    n_heads = 4
    head_dim = D // n_heads
    q_rank, rank = 12, 2
    theta = 500000.0
    hidden = math.floor(8 / 3 * D)   # T6MLP hidden_dim = 85

    key = jax.random.PRNGKey(0)
    ks = jax.random.split(key, 10)
    scale = 0.05
    params = {
        'W_A_q': jax.random.normal(ks[0], (D, n_heads * q_rank), jnp.float32) * scale,
        'W_A_k': jax.random.normal(ks[1], (D, n_heads * rank), jnp.float32) * scale,
        'W_A_v': jax.random.normal(ks[2], (D, n_heads * rank), jnp.float32) * scale,
        'W_B_q': jax.random.normal(ks[3], (D, q_rank * head_dim), jnp.float32) * scale,
        'W_B_k': jax.random.normal(ks[4], (D, rank * head_dim), jnp.float32) * scale,
        'W_B_v': jax.random.normal(ks[5], (D, rank * head_dim), jnp.float32) * scale,
        'c_fc1': jax.random.normal(ks[6], (D, hidden), jnp.float32) * scale,
        'c_fc2': jax.random.normal(ks[7], (D, hidden), jnp.float32) * scale,
        # PyTorch __init__ zeros c_proj; small random init here so the kernel
        # path is actually exercised (synthetic weights, not a checkpoint).
        'c_proj': jax.random.normal(ks[8], (hidden, D), jnp.float32) * scale,
    }
    x = jax.random.normal(ks[9], (B, S, D), jnp.float32)

    # RoPE tables: freqs_cis = cos + i*sin, shape (S, head_dim//2)
    half = head_dim // 2
    inv_freq = 1.0 / (theta ** (jnp.arange(half, dtype=jnp.float32) * 2.0 / head_dim))
    freqs = jnp.outer(jnp.arange(S, dtype=jnp.float32), inv_freq)
    cos, sin = jnp.cos(freqs), jnp.sin(freqs)

    out = t6_block_forward(params, x, cos, sin,
                           n_heads=n_heads, head_dim=head_dim,
                           q_rank=q_rank, rank=rank)
    out = jax.block_until_ready(out)

    # Reference uses the original interleaved RoPE + explicit causal mask.
    idx = jnp.arange(S)
    mask = jnp.where(idx[None, :] <= idx[:, None], 0.0, -1e9).astype(jnp.float32)
    ref = t6_block_ref(params, x, cos, sin, mask,
                       n_heads=n_heads, head_dim=head_dim,
                       q_rank=q_rank, rank=rank)
    np.testing.assert_allclose(np.asarray(out), np.asarray(ref),
                               rtol=1e-2, atol=1e-2)
    print("KERNEL_OK")
</pallas_src>

<mosaic_0001>
module attributes {stable_mosaic.version = 11 : i64} {
  func.func @_t6_block_kernel(%arg0: i32, %arg1: memref<1x8x32xf32, #tpu.memory_space<vmem>>, %arg2: memref<32x256xbf16, #tpu.memory_space<vmem>>, %arg3: memref<8x8xf32, #tpu.memory_space<vmem>>, %arg4: memref<32x512xbf16, #tpu.memory_space<vmem>>, %arg5: memref<256x32xbf16, #tpu.memory_space<vmem>>, %arg6: memref<1x8x32xf32, #tpu.memory_space<vmem>>) attributes {dimension_semantics = [#tpu.dimension_semantics<parallel>], iteration_bounds = array<i64: 2>, scalar_prefetch = 0 : i64, scratch_operands = 0 : i64, tpu.core_type = #tpu.core_type<tc>, window_params = [{transform_indices = @transform_0, window_bounds = array<i64: 1, 8, 32>}, {pipeline_mode = #tpu.pipeline_mode<synchronous>, transform_indices = @transform_1, window_bounds = array<i64: 32, 256>}, {pipeline_mode = #tpu.pipeline_mode<synchronous>, transform_indices = @transform_2, window_bounds = array<i64: 8, 8>}, {pipeline_mode = #tpu.pipeline_mode<synchronous>, transform_indices = @transform_3, window_bounds = array<i64: 32, 512>}, {pipeline_mode = #tpu.pipeline_mode<synchronous>, transform_indices = @transform_4, window_bounds = array<i64: 256, 32>}, {transform_indices = @transform_5, window_bounds = array<i64: 1, 8, 32>}]} {
    %c0 = arith.constant 0 : index
    %c0_0 = arith.constant 0 : index
    %c0_1 = arith.constant 0 : index
    %0 = vector.load %arg1[%c0, %c0_0, %c0_1] : memref<1x8x32xf32, #tpu.memory_space<vmem>>, vector<1x8x32xf32>
    %1 = vector.shape_cast %0 : vector<1x8x32xf32> to vector<8x32xf32>
    %2 = arith.mulf %1, %1 : vector<8x32xf32>
    %cst = arith.constant dense<0.000000e+00> : vector<8xf32>
    %3 = vector.multi_reduction <add>, %2, %cst [1] : vector<8x32xf32> to vector<8xf32>
    %4 = vector.shape_cast %3 : vector<8xf32> to vector<8x1xf32>
    %cst_2 = arith.constant 3.200000e+01 : f32
    %5 = vector.broadcast %cst_2 : f32 to vector<8x1xf32>
    %6 = arith.divf %4, %5 : vector<8x1xf32>
    %cst_3 = arith.constant 1.1920929E-7 : f32
    %7 = vector.broadcast %cst_3 : f32 to vector<8x1xf32>
    %8 = arith.addf %6, %7 : vector<8x1xf32>
    %9 = math.rsqrt %8 : vector<8x1xf32>
    %10 = vector.broadcast %9 : vector<8x1xf32> to vector<8x32xf32>
    %11 = arith.mulf %1, %10 : vector<8x32xf32>
    %12 = arith.truncf %11 : vector<8x32xf32> to vector<8x32xbf16>
    %c0_4 = arith.constant 0 : index
    %c0_5 = arith.constant 0 : index
    %13 = vector.load %arg2[%c0_4, %c0_5] : memref<32x256xbf16, #tpu.memory_space<vmem>>, vector<32x256xbf16>
    %cst_6 = arith.constant dense<0.000000e+00> : vector<8x256xf32>
    %14 = tpu.matmul %12, %13, %cst_6 {dimension_numbers = #tpu.dot_dimension_numbers<[1], [0], [0], [1], [0, 0, 1, 1], [], []>} : vector<8x32xbf16>, vector<32x256xbf16>, vector<8x256xf32> -> vector<8x256xf32>
    %c0_7 = arith.constant 0 : index
    %c0_8 = arith.constant 0 : index
    %15 = vector.load %arg3[%c0_7, %c0_8] : memref<8x8xf32, #tpu.memory_space<vmem>>, vector<8x4xf32>
    %c0_9 = arith.constant 0 : index
    %c4 = arith.constant 4 : index
    %16 = vector.load %arg3[%c0_9, %c4] : memref<8x8xf32, #tpu.memory_space<vmem>>, vector<8x4xf32>
    %17 = vector.extract_strided_slice %14 {offsets = [0, 64], sizes = [8, 8], strides = [1, 1]} : vector<8x256xf32> to vector<8x8xf32>
    %18 = vector.extract_strided_slice %14 {offsets = [0, 72], sizes = [8, 8], strides = [1, 1]} : vector<8x256xf32> to vector<8x8xf32>
    %19 = vector.extract_strided_slice %14 {offsets = [0, 80], sizes = [8, 8], strides = [1, 1]} : vector<8x256xf32> to vector<8x8xf32>
    %20 = vector.extract_strided_slice %14 {offsets = [0, 88], sizes = [8, 8], strides = [1, 1]} : vector<8x256xf32> to vector<8x8xf32>
    %21 = vector.extract_strided_slice %14 {offsets = [0, 96], sizes = [8, 8], strides = [1, 1]} : vector<8x256xf32> to vector<8x8xf32>
    %22 = vector.extract_strided_slice %14 {offsets = [0, 104], sizes = [8, 8], strides = [1, 1]} : vector<8x256xf32> to vector<8x8xf32>
    %23 = vector.extract_strided_slice %14 {offsets = [0, 112], sizes = [8, 8], strides = [1, 1]} : vector<8x256xf32> to vector<8x8xf32>
    %24 = vector.extract_strided_slice %14 {offsets = [0, 120], sizes = [8, 8], strides = [1, 1]} : vector<8x256xf32> to vector<8x8xf32>
    %25 = vector.extract_strided_slice %14 {offsets = [0, 128], sizes = [8, 8], strides = [1, 1]} : vector<8x256xf32> to vector<8x8xf32>
    %26 = vector.extract_strided_slice %14 {offsets = [0, 136], sizes = [8, 8], strides = [1, 1]} : vector<8x256xf32> to vector<8x8xf32>
    %27 = vector.extract_strided_slice %14 {offsets = [0, 144], sizes = [8, 8], strides = [1, 1]} : vector<8x256xf32> to vector<8x8xf32>
    %28 = vector.extract_strided_slice %14 {offsets = [0, 152], sizes = [8, 8], strides = [1, 1]} : vector<8x256xf32> to vector<8x8xf32>
    %29 = vector.extract_strided_slice %14 {offsets = [0, 160], sizes = [8, 8], strides = [1, 1]} : vector<8x256xf32> to vector<8x8xf32>
    %30 = vector.extract_strided_slice %14 {offsets = [0, 168], sizes = [8, 8], strides = [1, 1]} : vector<8x256xf32> to vector<8x8xf32>
    %31 = vector.extract_strided_slice %14 {offsets = [0, 176], sizes = [8, 8], strides = [1, 1]} : vector<8x256xf32> to vector<8x8xf32>
    %32 = vector.extract_strided_slice %14 {offsets = [0, 184], sizes = [8, 8], strides = [1, 1]} : vector<8x256xf32> to vector<8x8xf32>
    %33 = tpu.iota {dimensions = array<i32: 0>} : vector<8x8xi32>
    %34 = tpu.iota {dimensions = array<i32: 1>} : vector<8x8xi32>
    %35 = arith.cmpi sle, %34, %33 : vector<8x8xi32>
    %cst_10 = arith.constant 0.000000e+00 : f32
    %cst_11 = arith.constant -1.000000e+09 : f32
    %36 = vector.broadcast %cst_10 : f32 to vector<8x8xf32>
    %37 = vector.broadcast %cst_11 : f32 to vector<8x8xf32>
    %38 = arith.select %35, %36, %37 : vector<8x8xi1>, vector<8x8xf32>
    %39 = vector.extract_strided_slice %14 {offsets = [0, 0], sizes = [8, 1], strides = [1, 1]} : vector<8x256xf32> to vector<8x1xf32>
    %40 = vector.broadcast %39 : vector<8x1xf32> to vector<8x8xf32>
    %41 = arith.mulf %40, %17 : vector<8x8xf32>
    %42 = vector.extract_strided_slice %14 {offsets = [0, 1], sizes = [8, 1], strides = [1, 1]} : vector<8x256xf32> to vector<8x1xf32>
    %43 = vector.broadcast %42 : vector<8x1xf32> to vector<8x8xf32>
    %44 = arith.mulf %43, %18 : vector<8x8xf32>
    %45 = arith.addf %41, %44 : vector<8x8xf32>
    %46 = vector.extract_strided_slice %14 {offsets = [0, 2], sizes = [8, 1], strides = [1, 1]} : vector<8x256xf32> to vector<8x1xf32>
    %47 = vector.broadcast %46 : vector<8x1xf32> to vector<8x8xf32>
    %48 = arith.mulf %47, %19 : vector<8x8xf32>
    %49 = arith.addf %45, %48 : vector<8x8xf32>
    %50 = vector.extract_strided_slice %14 {offsets = [0, 3], sizes = [8, 1], strides = [1, 1]} : vector<8x256xf32> to vector<8x1xf32>
    %51 = vector.broadcast %50 : vector<8x1xf32> to vector<8x8xf32>
    %52 = arith.mulf %51, %20 : vector<8x8xf32>
    %53 = arith.addf %49, %52 : vector<8x8xf32>
    %54 = vector.extract_strided_slice %14 {offsets = [0, 4], sizes = [8, 1], strides = [1, 1]} : vector<8x256xf32> to vector<8x1xf32>
    %55 = vector.broadcast %54 : vector<8x1xf32> to vector<8x8xf32>
    %56 = arith.mulf %55, %21 : vector<8x8xf32>
    %57 = arith.addf %53, %56 : vector<8x8xf32>
    %58 = vector.extract_strided_slice %14 {offsets = [0, 5], sizes = [8, 1], strides = [1, 1]} : vector<8x256xf32> to vector<8x1xf32>
    %59 = vector.broadcast %58 : vector<8x1xf32> to vector<8x8xf32>
    %60 = arith.mulf %59, %22 : vector<8x8xf32>
    %61 = arith.addf %57, %60 : vector<8x8xf32>
    %62 = vector.extract_strided_slice %14 {offsets = [0, 6], sizes = [8, 1], strides = [1, 1]} : vector<8x256xf32> to vector<8x1xf32>
    %63 = vector.broadcast %62 : vector<8x1xf32> to vector<8x8xf32>
    %64 = arith.mulf %63, %23 : vector<8x8xf32>
    %65 = arith.addf %61, %64 : vector<8x8xf32>
    %66 = vector.extract_strided_slice %14 {offsets = [0, 7], sizes = [8, 1], strides = [1, 1]} : vector<8x256xf32> to vector<8x1xf32>
    %67 = vector.broadcast %66 : vector<8x1xf32> to vector<8x8xf32>
    %68 = arith.mulf %67, %24 : vector<8x8xf32>
    %69 = arith.addf %65, %68 : vector<8x8xf32>
    %70 = vector.extract_strided_slice %14 {offsets = [0, 8], sizes = [8, 1], strides = [1, 1]} : vector<8x256xf32> to vector<8x1xf32>
    %71 = vector.broadcast %70 : vector<8x1xf32> to vector<8x8xf32>
    %72 = arith.mulf %71, %25 : vector<8x8xf32>
    %73 = arith.addf %69, %72 : vector<8x8xf32>
    %74 = vector.extract_strided_slice %14 {offsets = [0, 9], sizes = [8, 1], strides = [1, 1]} : vector<8x256xf32> to vector<8x1xf32>
    %75 = vector.broadcast %74 : vector<8x1xf32> to vector<8x8xf32>
    %76 = arith.mulf %75, %26 : vector<8x8xf32>
    %77 = arith.addf %73, %76 : vector<8x8xf32>
    %78 = vector.extract_strided_slice %14 {offsets = [0, 10], sizes = [8, 1], strides = [1, 1]} : vector<8x256xf32> to vector<8x1xf32>
    %79 = vector.broadcast %78 : vector<8x1xf32> to vector<8x8xf32>
    %80 = arith.mulf %79, %27 : vector<8x8xf32>
    %81 = arith.addf %77, %80 : vector<8x8xf32>
    %82 = vector.extract_strided_slice %14 {offsets = [0, 11], sizes = [8, 1], strides = [1, 1]} : vector<8x256xf32> to vector<8x1xf32>
    %83 = vector.broadcast %82 : vector<8x1xf32> to vector<8x8xf32>
    %84 = arith.mulf %83, %28 : vector<8x8xf32>
    %85 = arith.addf %81, %84 : vector<8x8xf32>
    %86 = vector.extract_strided_slice %85 {offsets = [0, 0], sizes = [8, 4], strides = [1, 1]} : vector<8x8xf32> to vector<8x4xf32>
    %87 = vector.extract_strided_slice %85 {offsets = [0, 4], sizes = [8, 4], strides = [1, 1]} : vector<8x8xf32> to vector<8x4xf32>
    %88 = arith.mulf %86, %15 : vector<8x4xf32>
    %89 = arith.mulf %87, %16 : vector<8x4xf32>
    %90 = arith.subf %88, %89 : vector<8x4xf32>
    %91 = arith.mulf %86, %16 : vector<8x4xf32>
    %92 = arith.mulf %87, %15 : vector<8x4xf32>
    %93 = arith.addf %91, %92 : vector<8x4xf32>
    %94 = tpu.concatenate %90, %93 in 1 : vector<8x4xf32>, vector<8x4xf32> -> vector<8x8xf32>
    %95 = vector.extract_strided_slice %14 {offsets = [0, 48], sizes = [8, 1], strides = [1, 1]} : vector<8x256xf32> to vector<8x1xf32>
    %96 = vector.broadcast %95 : vector<8x1xf32> to vector<8x8xf32>
    %97 = arith.mulf %96, %29 : vector<8x8xf32>
    %98 = vector.extract_strided_slice %14 {offsets = [0, 49], sizes = [8, 1], strides = [1, 1]} : vector<8x256xf32> to vector<8x1xf32>
    %99 = vector.broadcast %98 : vector<8x1xf32> to vector<8x8xf32>
    %100 = arith.mulf %99, %30 : vector<8x8xf32>
    %101 = arith.addf %97, %100 : vector<8x8xf32>
    %102 = vector.extract_strided_slice %101 {offsets = [0, 0], sizes = [8, 4], strides = [1, 1]} : vector<8x8xf32> to vector<8x4xf32>
    %103 = vector.extract_strided_slice %101 {offsets = [0, 4], sizes = [8, 4], strides = [1, 1]} : vector<8x8xf32> to vector<8x4xf32>
    %104 = arith.mulf %102, %15 : vector<8x4xf32>
    %105 = arith.mulf %103, %16 : vector<8x4xf32>
    %106 = arith.subf %104, %105 : vector<8x4xf32>
    %107 = arith.mulf %102, %16 : vector<8x4xf32>
    %108 = arith.mulf %103, %15 : vector<8x4xf32>
    %109 = arith.addf %107, %108 : vector<8x4xf32>
    %110 = tpu.concatenate %106, %109 in 1 : vector<8x4xf32>, vector<8x4xf32> -> vector<8x8xf32>
    %111 = vector.extract_strided_slice %14 {offsets = [0, 56], sizes = [8, 1], strides = [1, 1]} : vector<8x256xf32> to vector<8x1xf32>
    %112 = vector.broadcast %111 : vector<8x1xf32> to vector<8x8xf32>
    %113 = arith.mulf %112, %31 : vector<8x8xf32>
    %114 = vector.extract_strided_slice %14 {offsets = [0, 57], sizes = [8, 1], strides = [1, 1]} : vector<8x256xf32> to vector<8x1xf32>
    %115 = vector.broadcast %114 : vector<8x1xf32> to vector<8x8xf32>
    %116 = arith.mulf %115, %32 : vector<8x8xf32>
    %117 = arith.addf %113, %116 : vector<8x8xf32>
    "tpu.trace_start"() <{level = 10 : i32, message = "sd,td->st"}> : () -> ()
    %cst_12 = arith.constant dense<0.000000e+00> : vector<8x8xf32>
    %118 = tpu.matmul %94, %110, %cst_12 {dimension_numbers = #tpu.dot_dimension_numbers<[1], [1], [0], [0], [0, 0, 1, 0], [], []>} : vector<8x8xf32>, vector<8x8xf32>, vector<8x8xf32> -> vector<8x8xf32>
    "tpu.trace_stop"() : () -> ()
    %119 = arith.addf %118, %38 : vector<8x8xf32>
    %cst_13 = arith.constant dense<0xFF800000> : vector<8xf32>
    %120 = vector.multi_reduction <maximumf>, %119, %cst_13 [1] : vector<8x8xf32> to vector<8xf32>
    %121 = vector.shape_cast %120 : vector<8xf32> to vector<8x1xf32>
    %122 = vector.broadcast %121 : vector<8x1xf32> to vector<8x8xf32>
    %123 = arith.subf %119, %122 : vector<8x8xf32>
    %124 = math.exp %123 : vector<8x8xf32>
    %cst_14 = arith.constant dense<0.000000e+00> : vector<8xf32>
    %125 = vector.multi_reduction <add>, %124, %cst_14 [1] : vector<8x8xf32> to vector<8xf32>
    %126 = vector.shape_cast %125 : vector<8xf32> to vector<8x1xf32>
    %127 = tpu.reciprocal %126 {approx = true} : vector<8x1xf32> -> vector<8x1xf32>
    %128 = vector.broadcast %127 : vector<8x1xf32> to vector<8x8xf32>
    %129 = arith.mulf %124, %128 : vector<8x8xf32>
    %cst_15 = arith.constant dense<0.000000e+00> : vector<8x8xf32>
    %130 = tpu.matmul %129, %117, %cst_15 {dimension_numbers = #tpu.dot_dimension_numbers<[1], [0], [0], [1], [0, 0, 1, 1], [], []>} : vector<8x8xf32>, vector<8x8xf32>, vector<8x8xf32> -> vector<8x8xf32>
    %131 = vector.extract_strided_slice %14 {offsets = [0, 12], sizes = [8, 1], strides = [1, 1]} : vector<8x256xf32> to vector<8x1xf32>
    %132 = vector.broadcast %131 : vector<8x1xf32> to vector<8x8xf32>
    %133 = arith.mulf %132, %17 : vector<8x8xf32>
    %134 = vector.extract_strided_slice %14 {offsets = [0, 13], sizes = [8, 1], strides = [1, 1]} : vector<8x256xf32> to vector<8x1xf32>
    %135 = vector.broadcast %134 : vector<8x1xf32> to vector<8x8xf32>
    %136 = arith.mulf %135, %18 : vector<8x8xf32>
    %137 = arith.addf %133, %136 : vector<8x8xf32>
    %138 = vector.extract_strided_slice %14 {offsets = [0, 14], sizes = [8, 1], strides = [1, 1]} : vector<8x256xf32> to vector<8x1xf32>
    %139 = vector.broadcast %138 : vector<8x1xf32> to vector<8x8xf32>
    %140 = arith.mulf %139, %19 : vector<8x8xf32>
    %141 = arith.addf %137, %140 : vector<8x8xf32>
    %142 = vector.extract_strided_slice %14 {offsets = [0, 15], sizes = [8, 1], strides = [1, 1]} : vector<8x256xf32> to vector<8x1xf32>
    %143 = vector.broadcast %142 : vector<8x1xf32> to vector<8x8xf32>
    %144 = arith.mulf %143, %20 : vector<8x8xf32>
    %145 = arith.addf %141, %144 : vector<8x8xf32>
    %146 = vector.extract_strided_slice %14 {offsets = [0, 16], sizes = [8, 1], strides = [1, 1]} : vector<8x256xf32> to vector<8x1xf32>
    %147 = vector.broadcast %146 : vector<8x1xf32> to vector<8x8xf32>
    %148 = arith.mulf %147, %21 : vector<8x8xf32>
    %149 = arith.addf %145, %148 : vector<8x8xf32>
    %150 = vector.extract_strided_slice %14 {offsets = [0, 17], sizes = [8, 1], strides = [1, 1]} : vector<8x256xf32> to vector<8x1xf32>
    %151 = vector.broadcast %150 : vector<8x1xf32> to vector<8x8xf32>
    %152 = arith.mulf %151, %22 : vector<8x8xf32>
    %153 = arith.addf %149, %152 : vector<8x8xf32>
    %154 = vector.extract_strided_slice %14 {offsets = [0, 18], sizes = [8, 1], strides = [1, 1]} : vector<8x256xf32> to vector<8x1xf32>
    %155 = vector.broadcast %154 : vector<8x1xf32> to vector<8x8xf32>
    %156 = arith.mulf %155, %23 : vector<8x8xf32>
    %157 = arith.addf %153, %156 : vector<8x8xf32>
    %158 = vector.extract_strided_slice %14 {offsets = [0, 19], sizes = [8, 1], strides = [1, 1]} : vector<8x256xf32> to vector<8x1xf32>
    %159 = vector.broadcast %158 : vector<8x1xf32> to vector<8x8xf32>
    %160 = arith.mulf %159, %24 : vector<8x8xf32>
    %161 = arith.addf %157, %160 : vector<8x8xf32>
    %162 = vector.extract_strided_slice %14 {offsets = [0, 20], sizes = [8, 1], strides = [1, 1]} : vector<8x256xf32> to vector<8x1xf32>
    %163 = vector.broadcast %162 : vector<8x1xf32> to vector<8x8xf32>
    %164 = arith.mulf %163, %25 : vector<8x8xf32>
    %165 = arith.addf %161, %164 : vector<8x8xf32>
    %166 = vector.extract_strided_slice %14 {offsets = [0, 21], sizes = [8, 1], strides = [1, 1]} : vector<8x256xf32> to vector<8x1xf32>
    %167 = vector.broadcast %166 : vector<8x1xf32> to vector<8x8xf32>
    %168 = arith.mulf %167, %26 : vector<8x8xf32>
    %169 = arith.addf %165, %168 : vector<8x8xf32>
    %170 = vector.extract_strided_slice %14 {offsets = [0, 22], sizes = [8, 1], strides = [1, 1]} : vector<8x256xf32> to vector<8x1xf32>
    %171 = vector.broadcast %170 : vector<8x1xf32> to vector<8x8xf32>
    %172 = arith.mulf %171, %27 : vector<8x8xf32>
    %173 = arith.addf %169, %172 : vector<8x8xf32>
    %174 = vector.extract_strided_slice %14 {offsets = [0, 23], sizes = [8, 1], strides = [1, 1]} : vector<8x256xf32> to vector<8x1xf32>
    %175 = vector.broadcast %174 : vector<8x1xf32> to vector<8x8xf32>
    %176 = arith.mulf %175, %28 : vector<8x8xf32>
    %177 = arith.addf %173, %176 : vector<8x8xf32>
    %178 = vector.extract_strided_slice %177 {offsets = [0, 0], sizes = [8, 4], strides = [1, 1]} : vector<8x8xf32> to vector<8x4xf32>
    %179 = vector.extract_strided_slice %177 {offsets = [0, 4], sizes = [8, 4], strides = [1, 1]} : vector<8x8xf32> to vector<8x4xf32>
    %180 = arith.mulf %178, %15 : vector<8x4xf32>
    %181 = arith.mulf %179, %16 : vector<8x4xf32>
    %182 = arith.subf %180, %181 : vector<8x4xf32>
    %183 = arith.mulf %178, %16 : vector<8x4xf32>
    %184 = arith.mulf %179, %15 : vector<8x4xf32>
    %185 = arith.addf %183, %184 : vector<8x4xf32>
    %186 = tpu.concatenate %182, %185 in 1 : vector<8x4xf32>, vector<8x4xf32> -> vector<8x8xf32>
    %187 = vector.extract_strided_slice %14 {offsets = [0, 50], sizes = [8, 1], strides = [1, 1]} : vector<8x256xf32> to vector<8x1xf32>
    %188 = vector.broadcast %187 : vector<8x1xf32> to vector<8x8xf32>
    %189 = arith.mulf %188, %29 : vector<8x8xf32>
    %190 = vector.extract_strided_slice %14 {offsets = [0, 51], sizes = [8, 1], strides = [1, 1]} : vector<8x256xf32> to vector<8x1xf32>
    %191 = vector.broadcast %190 : vector<8x1xf32> to vector<8x8xf32>
    %192 = arith.mulf %191, %30 : vector<8x8xf32>
    %193 = arith.addf %189, %192 : vector<8x8xf32>
    %194 = vector.extract_strided_slice %193 {offsets = [0, 0], sizes = [8, 4], strides = [1, 1]} : vector<8x8xf32> to vector<8x4xf32>
    %195 = vector.extract_strided_slice %193 {offsets = [0, 4], sizes = [8, 4], strides = [1, 1]} : vector<8x8xf32> to vector<8x4xf32>
    %196 = arith.mulf %194, %15 : vector<8x4xf32>
    %197 = arith.mulf %195, %16 : vector<8x4xf32>
    %198 = arith.subf %196, %197 : vector<8x4xf32>
    %199 = arith.mulf %194, %16 : vector<8x4xf32>
    %200 = arith.mulf %195, %15 : vector<8x4xf32>
    %201 = arith.addf %199, %200 : vector<8x4xf32>
    %202 = tpu.concatenate %198, %201 in 1 : vector<8x4xf32>, vector<8x4xf32> -> vector<8x8xf32>
    %203 = vector.extract_strided_slice %14 {offsets = [0, 58], sizes = [8, 1], strides = [1, 1]} : vector<8x256xf32> to vector<8x1xf32>
    %204 = vector.broadcast %203 : vector<8x1xf32> to vector<8x8xf32>
    %205 = arith.mulf %204, %31 : vector<8x8xf32>
    %206 = vector.extract_strided_slice %14 {offsets = [0, 59], sizes = [8, 1], strides = [1, 1]} : vector<8x256xf32> to vector<8x1xf32>
    %207 = vector.broadcast %206 : vector<8x1xf32> to vector<8x8xf32>
    %208 = arith.mulf %207, %32 : vector<8x8xf32>
    %209 = arith.addf %205, %208 : vector<8x8xf32>
    "tpu.trace_start"() <{level = 10 : i32, message = "sd,td->st"}> : () -> ()
    %cst_16 = arith.constant dense<0.000000e+00> : vector<8x8xf32>
    %210 = tpu.matmul %186, %202, %cst_16 {dimension_numbers = #tpu.dot_dimension_numbers<[1], [1], [0], [0], [0, 0, 1, 0], [], []>} : vector<8x8xf32>, vector<8x8xf32>, vector<8x8xf32> -> vector<8x8xf32>
    "tpu.trace_stop"() : () -> ()
    %211 = arith.addf %210, %38 : vector<8x8xf32>
    %cst_17 = arith.constant dense<0xFF800000> : vector<8xf32>
    %212 = vector.multi_reduction <maximumf>, %211, %cst_17 [1] : vector<8x8xf32> to vector<8xf32>
    %213 = vector.shape_cast %212 : vector<8xf32> to vector<8x1xf32>
    %214 = vector.broadcast %213 : vector<8x1xf32> to vector<8x8xf32>
    %215 = arith.subf %211, %214 : vector<8x8xf32>
    %216 = math.exp %215 : vector<8x8xf32>
    %cst_18 = arith.constant dense<0.000000e+00> : vector<8xf32>
    %217 = vector.multi_reduction <add>, %216, %cst_18 [1] : vector<8x8xf32> to vector<8xf32>
    %218 = vector.shape_cast %217 : vector<8xf32> to vector<8x1xf32>
    %219 = tpu.reciprocal %218 {approx = true} : vector<8x1xf32> -> vector<8x1xf32>
    %220 = vector.broadcast %219 : vector<8x1xf32> to vector<8x8xf32>
    %221 = arith.mulf %216, %220 : vector<8x8xf32>
    %cst_19 = arith.constant dense<0.000000e+00> : vector<8x8xf32>
    %222 = tpu.matmul %221, %209, %cst_19 {dimension_numbers = #tpu.dot_dimension_numbers<[1], [0], [0], [1], [0, 0, 1, 1], [], []>} : vector<8x8xf32>, vector<8x8xf32>, vector<8x8xf32> -> vector<8x8xf32>
    %223 = vector.extract_strided_slice %14 {offsets = [0, 24], sizes = [8, 1], strides = [1, 1]} : vector<8x256xf32> to vector<8x1xf32>
    %224 = vector.broadcast %223 : vector<8x1xf32> to vector<8x8xf32>
    %225 = arith.mulf %224, %17 : vector<8x8xf32>
    %226 = vector.extract_strided_slice %14 {offsets = [0, 25], sizes = [8, 1], strides = [1, 1]} : vector<8x256xf32> to vector<8x1xf32>
    %227 = vector.broadcast %226 : vector<8x1xf32> to vector<8x8xf32>
    %228 = arith.mulf %227, %18 : vector<8x8xf32>
    %229 = arith.addf %225, %228 : vector<8x8xf32>
    %230 = vector.extract_strided_slice %14 {offsets = [0, 26], sizes = [8, 1], strides = [1, 1]} : vector<8x256xf32> to vector<8x1xf32>
    %231 = vector.broadcast %230 : vector<8x1xf32> to vector<8x8xf32>
    %232 = arith.mulf %231, %19 : vector<8x8xf32>
    %233 = arith.addf %229, %232 : vector<8x8xf32>
    %234 = vector.extract_strided_slice %14 {offsets = [0, 27], sizes = [8, 1], strides = [1, 1]} : vector<8x256xf32> to vector<8x1xf32>
    %235 = vector.broadcast %234 : vector<8x1xf32> to vector<8x8xf32>
    %236 = arith.mulf %235, %20 : vector<8x8xf32>
    %237 = arith.addf %233, %236 : vector<8x8xf32>
    %238 = vector.extract_strided_slice %14 {offsets = [0, 28], sizes = [8, 1], strides = [1, 1]} : vector<8x256xf32> to vector<8x1xf32>
    %239 = vector.broadcast %238 : vector<8x1xf32> to vector<8x8xf32>
    %240 = arith.mulf %239, %21 : vector<8x8xf32>
    %241 = arith.addf %237, %240 : vector<8x8xf32>
    %242 = vector.extract_strided_slice %14 {offsets = [0, 29], sizes = [8, 1], strides = [1, 1]} : vector<8x256xf32> to vector<8x1xf32>
    %243 = vector.broadcast %242 : vector<8x1xf32> to vector<8x8xf32>
    %244 = arith.mulf %243, %22 : vector<8x8xf32>
    %245 = arith.addf %241, %244 : vector<8x8xf32>
    %246 = vector.extract_strided_slice %14 {offsets = [0, 30], sizes = [8, 1], strides = [1, 1]} : vector<8x256xf32> to vector<8x1xf32>
    %247 = vector.broadcast %246 : vector<8x1xf32> to vector<8x8xf32>
    %248 = arith.mulf %247, %23 : vector<8x8xf32>
    %249 = arith.addf %245, %248 : vector<8x8xf32>
    %250 = vector.extract_strided_slice %14 {offsets = [0, 31], sizes = [8, 1], strides = [1, 1]} : vector<8x256xf32> to vector<8x1xf32>
    %251 = vector.broadcast %250 : vector<8x1xf32> to vector<8x8xf32>
    %252 = arith.mulf %251, %24 : vector<8x8xf32>
    %253 = arith.addf %249, %252 : vector<8x8xf32>
    %254 = vector.extract_strided_slice %14 {offsets = [0, 32], sizes = [8, 1], strides = [1, 1]} : vector<8x256xf32> to vector<8x1xf32>
    %255 = vector.broadcast %254 : vector<8x1xf32> to vector<8x8xf32>
    %256 = arith.mulf %255, %25 : vector<8x8xf32>
    %257 = arith.addf %253, %256 : vector<8x8xf32>
    %258 = vector.extract_strided_slice %14 {offsets = [0, 33], sizes = [8, 1], strides = [1, 1]} : vector<8x256xf32> to vector<8x1xf32>
    %259 = vector.broadcast %258 : vector<8x1xf32> to vector<8x8xf32>
    %260 = arith.mulf %259, %26 : vector<8x8xf32>
    %261 = arith.addf %257, %260 : vector<8x8xf32>
    %262 = vector.extract_strided_slice %14 {offsets = [0, 34], sizes = [8, 1], strides = [1, 1]} : vector<8x256xf32> to vector<8x1xf32>
    %263 = vector.broadcast %262 : vector<8x1xf32> to vector<8x8xf32>
    %264 = arith.mulf %263, %27 : vector<8x8xf32>
    %265 = arith.addf %261, %264 : vector<8x8xf32>
    %266 = vector.extract_strided_slice %14 {offsets = [0, 35], sizes = [8, 1], strides = [1, 1]} : vector<8x256xf32> to vector<8x1xf32>
    %267 = vector.broadcast %266 : vector<8x1xf32> to vector<8x8xf32>
    %268 = arith.mulf %267, %28 : vector<8x8xf32>
    %269 = arith.addf %265, %268 : vector<8x8xf32>
    %270 = vector.extract_strided_slice %269 {offsets = [0, 0], sizes = [8, 4], strides = [1, 1]} : vector<8x8xf32> to vector<8x4xf32>
    %271 = vector.extract_strided_slice %269 {offsets = [0, 4], sizes = [8, 4], strides = [1, 1]} : vector<8x8xf32> to vector<8x4xf32>
    %272 = arith.mulf %270, %15 : vector<8x4xf32>
    %273 = arith.mulf %271, %16 : vector<8x4xf32>
    %274 = arith.subf %272, %273 : vector<8x4xf32>
    %275 = arith.mulf %270, %16 : vector<8x4xf32>
    %276 = arith.mulf %271, %15 : vector<8x4xf32>
    %277 = arith.addf %275, %276 : vector<8x4xf32>
    %278 = tpu.concatenate %274, %277 in 1 : vector<8x4xf32>, vector<8x4xf32> -> vector<8x8xf32>
    %279 = vector.extract_strided_slice %14 {offsets = [0, 52], sizes = [8, 1], strides = [1, 1]} : vector<8x256xf32> to vector<8x1xf32>
    %280 = vector.broadcast %279 : vector<8x1xf32> to vector<8x8xf32>
    %281 = arith.mulf %280, %29 : vector<8x8xf32>
    %282 = vector.extract_strided_slice %14 {offsets = [0, 53], sizes = [8, 1], strides = [1, 1]} : vector<8x256xf32> to vector<8x1xf32>
    %283 = vector.broadcast %282 : vector<8x1xf32> to vector<8x8xf32>
    %284 = arith.mulf %283, %30 : vector<8x8xf32>
    %285 = arith.addf %281, %284 : vector<8x8xf32>
    %286 = vector.extract_strided_slice %285 {offsets = [0, 0], sizes = [8, 4], strides = [1, 1]} : vector<8x8xf32> to vector<8x4xf32>
    %287 = vector.extract_strided_slice %285 {offsets = [0, 4], sizes = [8, 4], strides = [1, 1]} : vector<8x8xf32> to vector<8x4xf32>
    %288 = arith.mulf %286, %15 : vector<8x4xf32>
    %289 = arith.mulf %287, %16 : vector<8x4xf32>
    %290 = arith.subf %288, %289 : vector<8x4xf32>
    %291 = arith.mulf %286, %16 : vector<8x4xf32>
    %292 = arith.mulf %287, %15 : vector<8x4xf32>
    %293 = arith.addf %291, %292 : vector<8x4xf32>
    %294 = tpu.concatenate %290, %293 in 1 : vector<8x4xf32>, vector<8x4xf32> -> vector<8x8xf32>
    %295 = vector.extract_strided_slice %14 {offsets = [0, 60], sizes = [8, 1], strides = [1, 1]} : vector<8x256xf32> to vector<8x1xf32>
    %296 = vector.broadcast %295 : vector<8x1xf32> to vector<8x8xf32>
    %297 = arith.mulf %296, %31 : vector<8x8xf32>
    %298 = vector.extract_strided_slice %14 {offsets = [0, 61], sizes = [8, 1], strides = [1, 1]} : vector<8x256xf32> to vector<8x1xf32>
    %299 = vector.broadcast %298 : vector<8x1xf32> to vector<8x8xf32>
    %300 = arith.mulf %299, %32 : vector<8x8xf32>
    %301 = arith.addf %297, %300 : vector<8x8xf32>
    "tpu.trace_start"() <{level = 10 : i32, message = "sd,td->st"}> : () -> ()
    %cst_20 = arith.constant dense<0.000000e+00> : vector<8x8xf32>
    %302 = tpu.matmul %278, %294, %cst_20 {dimension_numbers = #tpu.dot_dimension_numbers<[1], [1], [0], [0], [0, 0, 1, 0], [], []>} : vector<8x8xf32>, vector<8x8xf32>, vector<8x8xf32> -> vector<8x8xf32>
    "tpu.trace_stop"() : () -> ()
    %303 = arith.addf %302, %38 : vector<8x8xf32>
    %cst_21 = arith.constant dense<0xFF800000> : vector<8xf32>
    %304 = vector.multi_reduction <maximumf>, %303, %cst_21 [1] : vector<8x8xf32> to vector<8xf32>
    %305 = vector.shape_cast %304 : vector<8xf32> to vector<8x1xf32>
    %306 = vector.broadcast %305 : vector<8x1xf32> to vector<8x8xf32>
    %307 = arith.subf %303, %306 : vector<8x8xf32>
    %308 = math.exp %307 : vector<8x8xf32>
    %cst_22 = arith.constant dense<0.000000e+00> : vector<8xf32>
    %309 = vector.multi_reduction <add>, %308, %cst_22 [1] : vector<8x8xf32> to vector<8xf32>
    %310 = vector.shape_cast %309 : vector<8xf32> to vector<8x1xf32>
    %311 = tpu.reciprocal %310 {approx = true} : vector<8x1xf32> -> vector<8x1xf32>
    %312 = vector.broadcast %311 : vector<8x1xf32> to vector<8x8xf32>
    %313 = arith.mulf %308, %312 : vector<8x8xf32>
    %cst_23 = arith.constant dense<0.000000e+00> : vector<8x8xf32>
    %314 = tpu.matmul %313, %301, %cst_23 {dimension_numbers = #tpu.dot_dimension_numbers<[1], [0], [0], [1], [0, 0, 1, 1], [], []>} : vector<8x8xf32>, vector<8x8xf32>, vector<8x8xf32> -> vector<8x8xf32>
    %315 = vector.extract_strided_slice %14 {offsets = [0, 36], sizes = [8, 1], strides = [1, 1]} : vector<8x256xf32> to vector<8x1xf32>
    %316 = vector.broadcast %315 : vector<8x1xf32> to vector<8x8xf32>
    %317 = arith.mulf %316, %17 : vector<8x8xf32>
    %318 = vector.extract_strided_slice %14 {offsets = [0, 37], sizes = [8, 1], strides = [1, 1]} : vector<8x256xf32> to vector<8x1xf32>
    %319 = vector.broadcast %318 : vector<8x1xf32> to vector<8x8xf32>
    %320 = arith.mulf %319, %18 : vector<8x8xf32>
    %321 = arith.addf %317, %320 : vector<8x8xf32>
    %322 = vector.extract_strided_slice %14 {offsets = [0, 38], sizes = [8, 1], strides = [1, 1]} : vector<8x256xf32> to vector<8x1xf32>
    %323 = vector.broadcast %322 : vector<8x1xf32> to vector<8x8xf32>
    %324 = arith.mulf %323, %19 : vector<8x8xf32>
    %325 = arith.addf %321, %324 : vector<8x8xf32>
    %326 = vector.extract_strided_slice %14 {offsets = [0, 39], sizes = [8, 1], strides = [1, 1]} : vector<8x256xf32> to vector<8x1xf32>
    %327 = vector.broadcast %326 : vector<8x1xf32> to vector<8x8xf32>
    %328 = arith.mulf %327, %20 : vector<8x8xf32>
    %329 = arith.addf %325, %328 : vector<8x8xf32>
    %330 = vector.extract_strided_slice %14 {offsets = [0, 40], sizes = [8, 1], strides = [1, 1]} : vector<8x256xf32> to vector<8x1xf32>
    %331 = vector.broadcast %330 : vector<8x1xf32> to vector<8x8xf32>
    %332 = arith.mulf %331, %21 : vector<8x8xf32>
    %333 = arith.addf %329, %332 : vector<8x8xf32>
    %334 = vector.extract_strided_slice %14 {offsets = [0, 41], sizes = [8, 1], strides = [1, 1]} : vector<8x256xf32> to vector<8x1xf32>
    %335 = vector.broadcast %334 : vector<8x1xf32> to vector<8x8xf32>
    %336 = arith.mulf %335, %22 : vector<8x8xf32>
    %337 = arith.addf %333, %336 : vector<8x8xf32>
    %338 = vector.extract_strided_slice %14 {offsets = [0, 42], sizes = [8, 1], strides = [1, 1]} : vector<8x256xf32> to vector<8x1xf32>
    %339 = vector.broadcast %338 : vector<8x1xf32> to vector<8x8xf32>
    %340 = arith.mulf %339, %23 : vector<8x8xf32>
    %341 = arith.addf %337, %340 : vector<8x8xf32>
    %342 = vector.extract_strided_slice %14 {offsets = [0, 43], sizes = [8, 1], strides = [1, 1]} : vector<8x256xf32> to vector<8x1xf32>
    %343 = vector.broadcast %342 : vector<8x1xf32> to vector<8x8xf32>
    %344 = arith.mulf %343, %24 : vector<8x8xf32>
    %345 = arith.addf %341, %344 : vector<8x8xf32>
    %346 = vector.extract_strided_slice %14 {offsets = [0, 44], sizes = [8, 1], strides = [1, 1]} : vector<8x256xf32> to vector<8x1xf32>
    %347 = vector.broadcast %346 : vector<8x1xf32> to vector<8x8xf32>
    %348 = arith.mulf %347, %25 : vector<8x8xf32>
    %349 = arith.addf %345, %348 : vector<8x8xf32>
    %350 = vector.extract_strided_slice %14 {offsets = [0, 45], sizes = [8, 1], strides = [1, 1]} : vector<8x256xf32> to vector<8x1xf32>
    %351 = vector.broadcast %350 : vector<8x1xf32> to vector<8x8xf32>
    %352 = arith.mulf %351, %26 : vector<8x8xf32>
    %353 = arith.addf %349, %352 : vector<8x8xf32>
    %354 = vector.extract_strided_slice %14 {offsets = [0, 46], sizes = [8, 1], strides = [1, 1]} : vector<8x256xf32> to vector<8x1xf32>
    %355 = vector.broadcast %354 : vector<8x1xf32> to vector<8x8xf32>
    %356 = arith.mulf %355, %27 : vector<8x8xf32>
    %357 = arith.addf %353, %356 : vector<8x8xf32>
    %358 = vector.extract_strided_slice %14 {offsets = [0, 47], sizes = [8, 1], strides = [1, 1]} : vector<8x256xf32> to vector<8x1xf32>
    %359 = vector.broadcast %358 : vector<8x1xf32> to vector<8x8xf32>
    %360 = arith.mulf %359, %28 : vector<8x8xf32>
    %361 = arith.addf %357, %360 : vector<8x8xf32>
    %362 = vector.extract_strided_slice %361 {offsets = [0, 0], sizes = [8, 4], strides = [1, 1]} : vector<8x8xf32> to vector<8x4xf32>
    %363 = vector.extract_strided_slice %361 {offsets = [0, 4], sizes = [8, 4], strides = [1, 1]} : vector<8x8xf32> to vector<8x4xf32>
    %364 = arith.mulf %362, %15 : vector<8x4xf32>
    %365 = arith.mulf %363, %16 : vector<8x4xf32>
    %366 = arith.subf %364, %365 : vector<8x4xf32>
    %367 = arith.mulf %362, %16 : vector<8x4xf32>
    %368 = arith.mulf %363, %15 : vector<8x4xf32>
    %369 = arith.addf %367, %368 : vector<8x4xf32>
    %370 = tpu.concatenate %366, %369 in 1 : vector<8x4xf32>, vector<8x4xf32> -> vector<8x8xf32>
    %371 = vector.extract_strided_slice %14 {offsets = [0, 54], sizes = [8, 1], strides = [1, 1]} : vector<8x256xf32> to vector<8x1xf32>
    %372 = vector.broadcast %371 : vector<8x1xf32> to vector<8x8xf32>
    %373 = arith.mulf %372, %29 : vector<8x8xf32>
    %374 = vector.extract_strided_slice %14 {offsets = [0, 55], sizes = [8, 1], strides = [1, 1]} : vector<8x256xf32> to vector<8x1xf32>
    %375 = vector.broadcast %374 : vector<8x1xf32> to vector<8x8xf32>
    %376 = arith.mulf %375, %30 : vector<8x8xf32>
    %377 = arith.addf %373, %376 : vector<8x8xf32>
    %378 = vector.extract_strided_slice %377 {offsets = [0, 0], sizes = [8, 4], strides = [1, 1]} : vector<8x8xf32> to vector<8x4xf32>
    %379 = vector.extract_strided_slice %377 {offsets = [0, 4], sizes = [8, 4], strides = [1, 1]} : vector<8x8xf32> to vector<8x4xf32>
    %380 = arith.mulf %378, %15 : vector<8x4xf32>
    %381 = arith.mulf %379, %16 : vector<8x4xf32>
    %382 = arith.subf %380, %381 : vector<8x4xf32>
    %383 = arith.mulf %378, %16 : vector<8x4xf32>
    %384 = arith.mulf %379, %15 : vector<8x4xf32>
    %385 = arith.addf %383, %384 : vector<8x4xf32>
    %386 = tpu.concatenate %382, %385 in 1 : vector<8x4xf32>, vector<8x4xf32> -> vector<8x8xf32>
    %387 = vector.extract_strided_slice %14 {offsets = [0, 62], sizes = [8, 1], strides = [1, 1]} : vector<8x256xf32> to vector<8x1xf32>
    %388 = vector.broadcast %387 : vector<8x1xf32> to vector<8x8xf32>
    %389 = arith.mulf %388, %31 : vector<8x8xf32>
    %390 = vector.extract_strided_slice %14 {offsets = [0, 63], sizes = [8, 1], strides = [1, 1]} : vector<8x256xf32> to vector<8x1xf32>
    %391 = vector.broadcast %390 : vector<8x1xf32> to vector<8x8xf32>
    %392 = arith.mulf %391, %32 : vector<8x8xf32>
    %393 = arith.addf %389, %392 : vector<8x8xf32>
    "tpu.trace_start"() <{level = 10 : i32, message = "sd,td->st"}> : () -> ()
    %cst_24 = arith.constant dense<0.000000e+00> : vector<8x8xf32>
    %394 = tpu.matmul %370, %386, %cst_24 {dimension_numbers = #tpu.dot_dimension_numbers<[1], [1], [0], [0], [0, 0, 1, 0], [], []>} : vector<8x8xf32>, vector<8x8xf32>, vector<8x8xf32> -> vector<8x8xf32>
    "tpu.trace_stop"() : () -> ()
    %395 = arith.addf %394, %38 : vector<8x8xf32>
    %cst_25 = arith.constant dense<0xFF800000> : vector<8xf32>
    %396 = vector.multi_reduction <maximumf>, %395, %cst_25 [1] : vector<8x8xf32> to vector<8xf32>
    %397 = vector.shape_cast %396 : vector<8xf32> to vector<8x1xf32>
    %398 = vector.broadcast %397 : vector<8x1xf32> to vector<8x8xf32>
    %399 = arith.subf %395, %398 : vector<8x8xf32>
    %400 = math.exp %399 : vector<8x8xf32>
    %cst_26 = arith.constant dense<0.000000e+00> : vector<8xf32>
    %401 = vector.multi_reduction <add>, %400, %cst_26 [1] : vector<8x8xf32> to vector<8xf32>
    %402 = vector.shape_cast %401 : vector<8xf32> to vector<8x1xf32>
    %403 = tpu.reciprocal %402 {approx = true} : vector<8x1xf32> -> vector<8x1xf32>
    %404 = vector.broadcast %403 : vector<8x1xf32> to vector<8x8xf32>
    %405 = arith.mulf %400, %404 : vector<8x8xf32>
    %cst_27 = arith.constant dense<0.000000e+00> : vector<8x8xf32>
    %406 = tpu.matmul %405, %393, %cst_27 {dimension_numbers = #tpu.dot_dimension_numbers<[1], [0], [0], [1], [0, 0, 1, 1], [], []>} : vector<8x8xf32>, vector<8x8xf32>, vector<8x8xf32> -> vector<8x8xf32>
    %407 = tpu.concatenate %130, %222, %314, %406 in 1 : vector<8x8xf32>, vector<8x8xf32>, vector<8x8xf32>, vector<8x8xf32> -> vector<8x32xf32>
    %408 = arith.addf %1, %407 : vector<8x32xf32>
    %409 = arith.mulf %408, %408 : vector<8x32xf32>
    %cst_28 = arith.constant dense<0.000000e+00> : vector<8xf32>
    %410 = vector.multi_reduction <add>, %409, %cst_28 [1] : vector<8x32xf32> to vector<8xf32>
    %411 = vector.shape_cast %410 : vector<8xf32> to vector<8x1xf32>
    %cst_29 = arith.constant 3.200000e+01 : f32
    %412 = vector.broadcast %cst_29 : f32 to vector<8x1xf32>
    %413 = arith.divf %411, %412 : vector<8x1xf32>
    %cst_30 = arith.constant 1.1920929E-7 : f32
    %414 = vector.broadcast %cst_30 : f32 to vector<8x1xf32>
    %415 = arith.addf %413, %414 : vector<8x1xf32>
    %416 = math.rsqrt %415 : vector<8x1xf32>
    %417 = vector.broadcast %416 : vector<8x1xf32> to vector<8x32xf32>
    %418 = arith.mulf %408, %417 : vector<8x32xf32>
    %419 = arith.truncf %418 : vector<8x32xf32> to vector<8x32xbf16>
    %c0_31 = arith.constant 0 : index
    %c0_32 = arith.constant 0 : index
    %420 = vector.load %arg4[%c0_31, %c0_32] : memref<32x512xbf16, #tpu.memory_space<vmem>>, vector<32x512xbf16>
    %cst_33 = arith.constant dense<0.000000e+00> : vector<8x512xf32>
    %421 = tpu.matmul %419, %420, %cst_33 {dimension_numbers = #tpu.dot_dimension_numbers<[1], [0], [0], [1], [0, 0, 1, 1], [], []>} : vector<8x32xbf16>, vector<32x512xbf16>, vector<8x512xf32> -> vector<8x512xf32>
    %422 = vector.extract_strided_slice %421 {offsets = [0, 0], sizes = [8, 256], strides = [1, 1]} : vector<8x512xf32> to vector<8x256xf32>
    %423 = vector.extract_strided_slice %421 {offsets = [0, 256], sizes = [8, 256], strides = [1, 1]} : vector<8x512xf32> to vector<8x256xf32>
    %cst_34 = arith.constant 0.000000e+00 : f32
    %424 = vector.broadcast %cst_34 : f32 to vector<8x256xf32>
    %425 = arith.subf %424, %422 : vector<8x256xf32>
    %426 = math.exp %425 : vector<8x256xf32>
    %cst_35 = arith.constant 1.000000e+00 : f32
    %427 = vector.broadcast %cst_35 : f32 to vector<8x256xf32>
    %428 = arith.addf %427, %426 : vector<8x256xf32>
    %cst_36 = arith.constant 1.000000e+00 : f32
    %429 = vector.broadcast %cst_36 : f32 to vector<8x256xf32>
    %430 = arith.divf %429, %428 : vector<8x256xf32>
    %431 = arith.mulf %422, %430 : vector<8x256xf32>
    %432 = arith.mulf %431, %423 : vector<8x256xf32>
    %433 = arith.truncf %432 : vector<8x256xf32> to vector<8x256xbf16>
    %c0_37 = arith.constant 0 : index
    %c0_38 = arith.constant 0 : index
    %434 = vector.load %arg5[%c0_37, %c0_38] : memref<256x32xbf16, #tpu.memory_space<vmem>>, vector<256x32xbf16>
    %cst_39 = arith.constant dense<0.000000e+00> : vector<8x32xf32>
    %435 = tpu.matmul %433, %434, %cst_39 {dimension_numbers = #tpu.dot_dimension_numbers<[1], [0], [0], [1], [0, 0, 1, 1], [], []>} : vector<8x256xbf16>, vector<256x32xbf16>, vector<8x32xf32> -> vector<8x32xf32>
    %436 = arith.addf %408, %435 : vector<8x32xf32>
    %c0_40 = arith.constant 0 : index
    %c0_41 = arith.constant 0 : index
    %c0_42 = arith.constant 0 : index
    %437 = vector.load %arg6[%c0_40, %c0_41, %c0_42] : memref<1x8x32xf32, #tpu.memory_space<vmem>>, vector<1x8x32xf32>
    %438 = vector.shape_cast %437 : vector<1x8x32xf32> to vector<8x32xf32>
    %439 = vector.shape_cast %436 : vector<8x32xf32> to vector<1x8x32xf32>
    tpu.vector_store %arg6[%c0_40, %c0_41, %c0_42], %439 {strides = array<i32>} : memref<1x8x32xf32, #tpu.memory_space<vmem>>, vector<1x8x32xf32>,
    return
  }
  func.func @transform_0(%arg0: i32) -> (i32, i32, i32) {
    %c0_i32 = arith.constant 0 : i32
    %c0_i32_0 = arith.constant 0 : i32
    %c0_i32_1 = arith.constant 0 : i32
    return %arg0, %c0_i32, %c0_i32_0 : i32, i32, i32
  }
  func.func @transform_1(%arg0: i32) -> (i32, i32) {
    %c0_i32 = arith.constant 0 : i32
    %c0_i32_0 = arith.constant 0 : i32
    %c0_i32_1 = arith.constant 0 : i32
    return %c0_i32, %c0_i32_0 : i32, i32
  }
  func.func @transform_2(%arg0: i32) -> (i32, i32) {
    %c0_i32 = arith.constant 0 : i32
    %c0_i32_0 = arith.constant 0 : i32
    %c0_i32_1 = arith.constant 0 : i32
    return %c0_i32, %c0_i32_0 : i32, i32
  }
  func.func @transform_3(%arg0: i32) -> (i32, i32) {
    %c0_i32 = arith.constant 0 : i32
    %c0_i32_0 = arith.constant 0 : i32
    %c0_i32_1 = arith.constant 0 : i32
    return %c0_i32, %c0_i32_0 : i32, i32
  }
  func.func @transform_4(%arg0: i32) -> (i32, i32) {
    %c0_i32 = arith.constant 0 : i32
    %c0_i32_0 = arith.constant 0 : i32
    %c0_i32_1 = arith.constant 0 : i32
    return %c0_i32, %c0_i32_0 : i32, i32
  }
  func.func @transform_5(%arg0: i32) -> (i32, i32, i32) {
    %c0_i32 = arith.constant 0 : i32
    %c0_i32_0 = arith.constant 0 : i32
    %c0_i32_1 = arith.constant 0 : i32
    return %arg0, %c0_i32, %c0_i32_0 : i32, i32, i32
  }
}

</mosaic_0001>

<llo_original>
// kernel: tpu_custom_call.1
$region0: #{tpu_custom_call.1}
  #allocation0 [shape = 'u32[]', space=smem, size = 0x4, offset = 0x4, fixed_abs, tag = 'smem constant byte address 0x4 - core index']
  #allocation1 [shape = 'u32[144,128]{1,0:T(1,128)}', space=vmem, size = 0x12000, scoped, tag = 'internal scratch']
  %s0 = inlined_call_operand.vmem [shape: f32[2,8,32], index: 0, kind: input, shape index: {}]
  %s1 = inlined_call_operand.vmem [shape: bf16[32,256], index: 1, kind: input, shape index: {}]
  %s2 = inlined_call_operand.vmem [shape: f32[8,8], index: 2, kind: input, shape index: {}]
  %s3 = inlined_call_operand.vmem [shape: bf16[32,512], index: 3, kind: input, shape index: {}]
  %s4 = inlined_call_operand.vmem [shape: bf16[256,32], index: 4, kind: input, shape index: {}]
  %s5 = inlined_call_operand.hbm [shape: f32[2,8,32], index: 5, kind: output, shape index: {}]
  %s6 = sld [smem:[#allocation0]]
  $region53: #{tpu_custom_call.1} parent=0
    _
  %s8 = ssub.s32 1, %s6
  %s9 = scalar_select 0, %s8, %s6
  $region1: #{tpu_custom_call.1} parent=0
    #allocation2 [shape = 'u8[8192]{0}', space=vmem, size = 0x2000, scoped, tag = 'output window, operand 0']
    #allocation3 [shape = 's32[2]{0}', space=sflag, size = 0x8, scoped, tag = 'scoped memory for tpu_custom_call.1']
    %10 = vsyncpa [#allocation3], 0
    %s11 = scalar_lea.sflag [#allocation3], 1
    %12 = vsyncpa %s11, 0
    loop: start=0, step=1, limit=4
    $region2: #{tpu_custom_call.1} parent=1 // loop_pre_header
      _
    $region3: #{tpu_custom_call.1} parent=1 // loop_header
      %s14 = sphi 0, %s18
      %p15 = scmp.ge.s32.totalorder %s14, 4
      %s24 = sphi 0, %s26
      %s27 = sphi 0, %s24
      %s28 = sphi 0, %s27
      %s44 = sphi 0, %s28
      %s48 = sphi 0, %s48
      %s50 = sphi 0, %s48
      %s51 = sphi 0, %s50
      %s65 = sphi 0, %s51
      %s69 = sphi 0, %s69
      %s71 = sphi 0, %s69
      %s72 = sphi 0, %s71
      %s86 = sphi 0, %s72
      %s90 = sphi 0, %s90
      %s92 = sphi 0, %s90
      %s93 = sphi 0, %s92
      %s107 = sphi 0, %s93
      %s111 = sphi 0, %s111
      %s113 = sphi 0, %s111
      %s114 = sphi 0, %s113
      %s128 = sphi 0, %s114
      %s134 = sphi 0, %s136
      %s137 = sphi 0, %s134
      %s138 = sphi 0, %s137
      %s154 = sphi 0, %s138
    $region4: #{tpu_custom_call.1} parent=1 // loop_header_branch
      %17 = sbr.rel (%p15) target = $region8
    $region5: #{tpu_custom_call.1} parent=1 // loop_body
      %s19 = ssub.s32 %s14, 1
      %s20 = ssub.s32 %s14, 2
      %s21 = sadd.s32 %s14, 1
      %s22 = ssub.s32 %s14, %s21
      %p23 = scmp.eq.s32.totalorder %s22, 0
      %s25 = sadd.s32 %s24, 1
      %s26 = scalar_select %p23, %s24, %s25
      %p29 = pneg %p23
      %p30 = scmp.eq.s32.totalorder %s14, 1
      %p31 = por %p29, %p30
      %p32 = scmp.ne.s32.totalorder %s24, %s27
      %p33 = scmp.eq.s32.totalorder %s14, 0
      %p34 = por %p32, %p33
      %p35 = scmp.ne.s32.totalorder %s24, %s27
      %p36 = scmp.eq.s32.totalorder %s19, 1
      %p37 = por %p35, %p36
      %p38 = scmp.ne.s32.totalorder %s27, %s28
      %p39 = scmp.eq.s32.totalorder %s19, 0
      %p40 = por %p38, %p39
      %p41 = scmp.ne.s32.totalorder %s27, %s28
      %p42 = scmp.eq.s32.totalorder %s20, 1
      %p43 = por %p41, %p42
      %p45 = scmp.ne.s32.totalorder %s28, %s44
      %p46 = scmp.eq.s32.totalorder %s20, 0
      %p47 = por %p45, %p46
      %s49 = sadd.s32 %s48, 1
      %p52 = scmp.eq.s32.totalorder %s14, 1
      %p53 = scmp.ne.s32.totalorder %s48, %s50
      %p54 = scmp.eq.s32.totalorder %s14, 0
      %p55 = por %p53, %p54
      %p56 = scmp.ne.s32.totalorder %s48, %s50
      %p57 = scmp.eq.s32.totalorder %s19, 1
      %p58 = por %p56, %p57
      %p59 = scmp.ne.s32.totalorder %s50, %s51
      %p60 = scmp.eq.s32.totalorder %s19, 0
      %p61 = por %p59, %p60
      %p62 = scmp.ne.s32.totalorder %s50, %s51
      %p63 = scmp.eq.s32.totalorder %s20, 1
      %p64 = por %p62, %p63
      %p66 = scmp.ne.s32.totalorder %s51, %s65
      %p67 = scmp.eq.s32.totalorder %s20, 0
      %p68 = por %p66, %p67
      %s70 = sadd.s32 %s69, 1
      %p73 = scmp.eq.s32.totalorder %s14, 1
      %p74 = scmp.ne.s32.totalorder %s69, %s71
      %p75 = scmp.eq.s32.totalorder %s14, 0
      %p76 = por %p74, %p75
      %p77 = scmp.ne.s32.totalorder %s69, %s71
      %p78 = scmp.eq.s32.totalorder %s19, 1
      %p79 = por %p77, %p78
      %p80 = scmp.ne.s32.totalorder %s71, %s72
      %p81 = scmp.eq.s32.totalorder %s19, 0
      %p82 = por %p80, %p81
      %p83 = scmp.ne.s32.totalorder %s71, %s72
      %p84 = scmp.eq.s32.totalorder %s20, 1
      %p85 = por %p83, %p84
      %p87 = scmp.ne.s32.totalorder %s72, %s86
      %p88 = scmp.eq.s32.totalorder %s20, 0
      %p89 = por %p87, %p88
      %s91 = sadd.s32 %s90, 1
      %p94 = scmp.eq.s32.totalorder %s14, 1
      %p95 = scmp.ne.s32.totalorder %s90, %s92
      %p96 = scmp.eq.s32.totalorder %s14, 0
      %p97 = por %p95, %p96
      %p98 = scmp.ne.s32.totalorder %s90, %s92
      %p99 = scmp.eq.s32.totalorder %s19, 1
      %p100 = por %p98, %p99
      %p101 = scmp.ne.s32.totalorder %s92, %s93
      %p102 = scmp.eq.s32.totalorder %s19, 0
      %p103 = por %p101, %p102
      %p104 = scmp.ne.s32.totalorder %s92, %s93
      %p105 = scmp.eq.s32.totalorder %s20, 1
      %p106 = por %p104, %p105
      %p108 = scmp.ne.s32.totalorder %s93, %s107
      %p109 = scmp.eq.s32.totalorder %s20, 0
      %p110 = por %p108, %p109
      %s112 = sadd.s32 %s111, 1
      %p115 = scmp.eq.s32.totalorder %s14, 1
      %p116 = scmp.ne.s32.totalorder %s111, %s113
      %p117 = scmp.eq.s32.totalorder %s14, 0
      %p118 = por %p116, %p117
      %p119 = scmp.ne.s32.totalorder %s111, %s113
      %p120 = scmp.eq.s32.totalorder %s19, 1
      %p121 = por %p119, %p120
      %p122 = scmp.ne.s32.totalorder %s113, %s114
      %p123 = scmp.eq.s32.totalorder %s19, 0
      %p124 = por %p122, %p123
      %p125 = scmp.ne.s32.totalorder %s113, %s114
      %p126 = scmp.eq.s32.totalorder %s20, 1
      %p127 = por %p125, %p126
      %p129 = scmp.ne.s32.totalorder %s114, %s128
      %p130 = scmp.eq.s32.totalorder %s20, 0
      %p131 = por %p129, %p130
      %s132 = ssub.s32 %s14, %s21
      %p133 = scmp.eq.s32.totalorder %s132, 0
      %s135 = sadd.s32 %s134, 1
      %s136 = scalar_select %p133, %s134, %s135
      %p139 = pneg %p133
      %p140 = scmp.eq.s32.totalorder %s14, 1
      %p141 = por %p139, %p140
      %p142 = scmp.ne.s32.totalorder %s134, %s137
      %p143 = scmp.eq.s32.totalorder %s14, 0
      %p144 = por %p142, %p143
      %p145 = scmp.ne.s32.totalorder %s134, %s137
      %p146 = scmp.eq.s32.totalorder %s19, 1
      %p147 = por %p145, %p146
      %p148 = scmp.ne.s32.totalorder %s137, %s138
      %p149 = scmp.eq.s32.totalorder %s19, 0
      %p150 = por %p148, %p149
      %p151 = scmp.ne.s32.totalorder %s137, %s138
      %p152 = scmp.eq.s32.totalorder %s20, 1
      %p153 = por %p151, %p152
      %p155 = scmp.ne.s32.totalorder %s138, %s154
      %p156 = scmp.eq.s32.totalorder %s20, 0
      %p157 = por %p155, %p156
      %p158 = scmp.le.s32.totalorder 1, %s14
      %p159 = scmp.lt.s32.totalorder %s14, 3
      %p160 = pnand %p158, %p159
      %p161 = pneg %p160
      // Predicated region
      $region9: #{tpu_custom_call.1} parent=5 // pred_check
        _
      $region10: #{tpu_custom_call.1} parent=5 // pred_check_branch
        %163 = sbr.rel (%p160) target = $region12
      $region11: #{tpu_custom_call.1} parent=5 // pred_region
        %s164 = ssub.s32 %s14, 1
        // Predicated region
        $region13: #{tpu_custom_call.1} parent=11 // pred_check
          %p165 = pneg %p61
        $region14: #{tpu_custom_call.1} parent=11 // pred_check_branch
          %167 = sbr.rel (%p165) target = $region16
        $region15: #{tpu_custom_call.1} parent=11 // pred_region
          _
        $region16: #{tpu_custom_call.1} parent=11 // pred_fallthru
          _
        // Predicated region
        $region17: #{tpu_custom_call.1} parent=11 // pred_check
          %p168 = pneg %p82
        $region18: #{tpu_custom_call.1} parent=11 // pred_check_branch
          %170 = sbr.rel (%p168) target = $region20
        $region19: #{tpu_custom_call.1} parent=11 // pred_region
          _
        $region20: #{tpu_custom_call.1} parent=11 // pred_fallthru
          _
        // Predicated region
        $region21: #{tpu_custom_call.1} parent=11 // pred_check
          %p171 = pneg %p103
        $region22: #{tpu_custom_call.1} parent=11 // pred_check_branch
          %173 = sbr.rel (%p171) target = $region24
        $region23: #{tpu_custom_call.1} parent=11 // pred_region
          _
        $region24: #{tpu_custom_call.1} parent=11 // pred_fallthru
          _
        // Predicated region
        $region25: #{tpu_custom_call.1} parent=11 // pred_check
          %p174 = pneg %p124
        $region26: #{tpu_custom_call.1} parent=11 // pred_check_branch
          %176 = sbr.rel (%p174) target = $region28
        $region27: #{tpu_custom_call.1} parent=11 // pred_region
          _
        $region28: #{tpu_custom_call.1} parent=11 // pred_fallthru
          _
      $region12: #{tpu_custom_call.1} parent=5 // pred_fallthru
        _
      %p177 = scmp.lt.s32.totalorder %s14, 2
      // Predicated region
      $region29: #{tpu_custom_call.1} parent=5 // pred_check
        %p178 = pneg %p177
      $region30: #{tpu_custom_call.1} parent=5 // pred_check_branch
        %180 = sbr.rel (%p178) target = $region32
      $region31: #{tpu_custom_call.1} parent=5 // pred_region
        // Predicated region
        $region33: #{tpu_custom_call.1} parent=31 // pred_check
          %p181 = pneg %p34
        $region34: #{tpu_custom_call.1} parent=31 // pred_check_branch
          %183 = sbr.rel (%p181) target = $region36
        $region35: #{tpu_custom_call.1} parent=31 // pred_region
          %p184 = scmp.lt.s32.totalorder %s14, 1
          %s185 = scalar_select %p184, %s14, 1
          %s186 = smul.addr %s185, 8
          %s187 = scalar_lea.vmem %s0, %s186
        $region36: #{tpu_custom_call.1} parent=31 // pred_fallthru
          _
      $region32: #{tpu_custom_call.1} parent=5 // pred_fallthru
        _
      %p188 = scmp.le.s32.totalorder 1, %s14
      %p189 = scmp.lt.s32.totalorder %s14, 3
      %p190 = pnand %p188, %p189
      %p191 = pneg %p190
      // Predicated region
      $region37: #{tpu_custom_call.1} parent=5 // pred_check
        _
      $region38: #{tpu_custom_call.1} parent=5 // pred_check_branch
        %193 = sbr.rel (%p190) target = $region40
      $region39: #{tpu_custom_call.1} parent=5 // pred_region
        %s194 = ssub.s32 %s14, 1
        %p195 = scmp.lt.s32.totalorder %s19, 1
        %s196 = scalar_select %p195, %s19, 1
        %s197 = smul.addr %s196, 8
        %s198 = scalar_lea.vmem %s0, %s197
        %p199 = pneg %p40
        %p200 = pneg %p37
        %p201 = pneg %p61
        %p202 = pneg %p58
        %p203 = pneg %p82
        %p204 = pneg %p79
        %p205 = pneg %p103
        %p206 = pneg %p100
        %p207 = pneg %p124
        %p208 = pneg %p121
        %p209 = pneg %p150
        %p210 = pneg %p147
        %s211 = sand.u32 %s137, 1
        %s212 = scalar_lea.sflag [#allocation3], %s211
        %s213 = sand.u32 %s137, 1
        %s214 = smul.addr %s213, 8
        %s215 = scalar_lea.vmem [#allocation2], %s214
        %p216 = scmp.lt.s32.totalorder %s19, 1
        %s217 = scalar_select %p216, %s19, 1
        %s218 = smul.addr %s217, 8
        %s219 = scalar_lea.vmem %s0, %s218
        %v221 = vld [vmem:[%s219] sm:$0xff]
        %v222 = vmul.f32 %v221, %v221
        %vm223 = vcmask 261120
        %v224 = vsel %vm223, %v222, 0.0
        %225 = vadd.xlane.f32.xlu0 %v224
        %v226 = vpop.xlane.xlu0 %225
        %v227 = vrcp.pop 32.0
        %v228 = vmul.f32 %v226, %v227
        %v229 = vadd.f32 %v228, 1.1920929e-07
        %v230 = vrsqrt.pop %v229
        %v231 = vmul.f32 %v221, %v230
        %v232 = vpack.c.bf16 %v231, %v231
        %v233 = vld [vmem:[%s1] sm:$0xff]
        %v234 = vld [vmem:[%s1 + $0x8] sm:$0xff]
        %v235 = vld [vmem:[%s1 + $0x10] sm:$0xff]
        %v236 = vld [vmem:[%s1 + $0x18] sm:$0xff]
        %v241 = vunpack.c.l.b16 %v233
        %v242 = vunpack.c.h.b16 %v233
        %v243 = vunpack.c.l.b16 %v234
        %v244 = vunpack.c.h.b16 %v234
        %v245 = vunpack.c.l.b16 %v235
        %v246 = vunpack.c.h.b16 %v235
        %v247 = vunpack.c.l.b16 %v236
        %v248 = vunpack.c.h.b16 %v236
        %v249 = vpack.c.b16 %v243, %v241
        %v250 = vpack.c.b16 %v244, %v242
        %v251 = vpack.c.b16 %v247, %v245
        %v252 = vpack.c.b16 %v248, %v246
        %v258 = vsel %vm223, %v232, 0
        %260 = vmatprep.subr.bf16.mxu0 0
        %261 = vmatpush1.bf16.msra.mxu0 0
        %262 = vmatprep.subr.bf16.mxu0 0
        %263 = vmatpush1.bf16.msra.mxu0 0
        %264 = vmatprep.subr.bf16.mxu0 0
        %265 = vmatpush1.bf16.msra.mxu0 0
        %266 = vmatprep.subr.bf16.mxu0 0
        %267 = vmatpush1.bf16.msra.mxu0 0
        %268 = vmatprep.subr.bf16.mxu0 0
        %269 = vmatpush1.bf16.msra.mxu0 0
        %270 = vmatprep.subr.bf16.mxu0 0
        %271 = vmatpush1.bf16.msra.mxu0 0
        %272 = vmatprep.subr.bf16.mxu0 %v252
        %273 = vmatpush1.bf16.msra.mxu0 %v251
        %274 = vmatprep.subr.bf16.mxu0 %v250
        %275 = vmatpush1.bf16.msra.mxu0 %v249
        %276 = vmatprep.subr.bf16.mxu0 0
        %277 = vmatpush2.bf16.msra.mxu0 0
        %278 = vmatprep.subr.bf16.mxu0 0
        %279 = vmatpush2.bf16.msra.mxu0 0
        %280 = vmatprep.subr.bf16.mxu0 0
        %281 = vmatpush2.bf16.msra.mxu0 0
        %282 = vmatprep.subr.bf16.mxu0 0
        %283 = vmatpush2.bf16.msra.mxu0 0
        %284 = vmatprep.subr.bf16.mxu0 0
        %285 = vmatpush2.bf16.msra.mxu0 0
        %286 = vmatprep.subr.bf16.mxu0 0
        %287 = vmatpush2.bf16.msra.mxu0 0
        %288 = vmatprep.subr.bf16.mxu0 0
        %289 = vmatpush2.bf16.msra.mxu0 0
        %290 = vmatprep.subr.bf16.mxu0 0
        %291 = vmatpush2.bf16.msra.mxu0 0
        %292 = vmatprep.mubr.bf16.mxu0 0
        %293 = vmatmul.mubr.bf16.gmra.mxu0 %v258
        %v294 = vpop.f32.mrf.mxu0
        %v295 = vadd.f32 0.0, %v294
        %v296 = vpop.f32.mrf.mxu0
        %v297 = vadd.f32 0.0, %v296
        %v298 = vpop.f32.mrf.mxu0
        %v299 = vpop.f32.mrf.mxu0
        %300 = vdwg.mxu0
        %v301 = vld [vmem:[%s2] sm:$0xff]
        %v302 = vlaneseq
        %v303 = vshrl.u32 %v302, 7
        %v304 = vlaneseq
        %v305 = vand.u32 %v304, 127
        %vm306 = vcmp.le.s32.totalorder %v305, %v303
        %v307 = vsel %vm306, 0.0, -1e+09
        %309 = vset.pattern.permute.xlu0 0
        %310 = vperm.xlu0 %309, %v295
        %v311 = vpop.permute.xlu0 %310
        %v313 = vmul.f32 %v311, %v295
        %314 = vset.pattern.permute.xlu0 1
        %315 = vperm.xlu0 %314, %v295
        %v316 = vpop.permute.xlu0 %315
        %v318 = vmul.f32 %v316, %v295
        %320 = vrot.lane.b32.xlu0 %v318, 120
        %v321 = vpop.permute.xlu0 %320
        %v323 = vadd.f32 %v313, %v321
        %324 = vset.pattern.permute.xlu0 2
        %325 = vperm.xlu0 %324, %v295
        %v326 = vpop.permute.xlu0 %325
        %v328 = vmul.f32 %v326, %v295
        %330 = vrot.lane.b32.xlu0 %v328, 112
        %v331 = vpop.permute.xlu0 %330
        %v333 = vadd.f32 %v323, %v331
        %334 = vset.pattern.permute.xlu0 3
        %335 = vperm.xlu0 %334, %v295
        %v336 = vpop.permute.xlu0 %335
        %v338 = vmul.f32 %v336, %v295
        %340 = vrot.lane.b32.xlu0 %v338, 104
        %v341 = vpop.permute.xlu0 %340
        %v343 = vadd.f32 %v333, %v341
        %344 = vset.pattern.permute.xlu0 4
        %345 = vperm.xlu0 %344, %v295
        %v346 = vpop.permute.xlu0 %345
        %v348 = vmul.f32 %v346, %v295
        %350 = vrot.lane.b32.xlu0 %v348, 96
        %v351 = vpop.permute.xlu0 %350
        %v353 = vadd.f32 %v343, %v351
        %354 = vset.pattern.permute.xlu0 5
        %355 = vperm.xlu0 %354, %v295
        %v356 = vpop.permute.xlu0 %355
        %v358 = vmul.f32 %v356, %v295
        %360 = vrot.lane.b32.xlu0 %v358, 88
        %v361 = vpop.permute.xlu0 %360
        %v363 = vadd.f32 %v353, %v361
        %364 = vset.pattern.permute.xlu0 6
        %365 = vperm.xlu0 %364, %v295
        %v366 = vpop.permute.xlu0 %365
        %v368 = vmul.f32 %v366, %v295
        %370 = vrot.lane.b32.xlu0 %v368, 80
        %v371 = vpop.permute.xlu0 %370
        %v373 = vadd.f32 %v363, %v371
        %374 = vset.pattern.permute.xlu0 7
        %375 = vperm.xlu0 %374, %v295
        %v376 = vpop.permute.xlu0 %375
        %v378 = vmul.f32 %v376, %v295
        %380 = vrot.lane.b32.xlu0 %v378, 72
        %v381 = vpop.permute.xlu0 %380
        %v383 = vadd.f32 %v373, %v381
        %384 = vset.pattern.permute.xlu0 8
        %385 = vperm.xlu0 %384, %v295
        %v386 = vpop.permute.xlu0 %385
        %v388 = vmul.f32 %v386, %v297
        %390 = vrot.lane.b32.xlu0 %v388, 64
        %v391 = vpop.permute.xlu0 %390
        %v393 = vadd.f32 %v383, %v391
        %394 = vset.pattern.permute.xlu0 9
        %395 = vperm.xlu0 %394, %v295
        %v396 = vpop.permute.xlu0 %395
        %v398 = vmul.f32 %v396, %v297
        %400 = vrot.lane.b32.xlu0 %v398, 56
        %v401 = vpop.permute.xlu0 %400
        %v403 = vadd.f32 %v393, %v401
        %404 = vset.pattern.permute.xlu0 10
        %405 = vperm.xlu0 %404, %v295
        %v406 = vpop.permute.xlu0 %405
        %v408 = vmul.f32 %v406, %v297
        %410 = vrot.lane.b32.xlu0 %v408, 48
        %v411 = vpop.permute.xlu0 %410
        %v413 = vadd.f32 %v403, %v411
        %414 = vset.pattern.permute.xlu0 11
        %415 = vperm.xlu0 %414, %v295
        %v416 = vpop.permute.xlu0 %415
        %v418 = vmul.f32 %v416, %v297
        %420 = vrot.lane.b32.xlu0 %v418, 40
        %v421 = vpop.permute.xlu0 %420
        %v423 = vadd.f32 %v413, %v421
        %425 = vrot.lane.b32.xlu0 %v301, 64
        %v426 = vpop.permute.xlu0 %425
        %v428 = vmul.f32 %v423, %v426
        %430 = vrot.lane.b32.xlu0 %v428, 124
        %v431 = vpop.permute.xlu0 %430
        %v433 = vsub.f32 %v428, %v431
        %434 = vrot.lane.b32.xlu0 %v301, 60
        %v435 = vpop.permute.xlu0 %434
        %v437 = vmul.f32 %v423, %v435
        %438 = vrot.lane.b32.xlu0 %v301, 68
        %v439 = vpop.permute.xlu0 %438
        %v441 = vmul.f32 %v423, %v439
        %443 = vrot.lane.b32.xlu0 %v441, 124
        %v444 = vpop.permute.xlu0 %443
        %v446 = vadd.f32 %v437, %v444
        %448 = vrot.lane.b32.xlu0 %v433, 64
        %v449 = vpop.permute.xlu0 %448
        %452 = vrot.lane.b32.xlu0 %v446, 68
        %v453 = vpop.permute.xlu0 %452
        %vm455 = vcmask 31744
        %v456 = vsel %vm455, %v449, %v453
        %457 = vset.pattern.permute.xlu0 48
        %458 = vperm.xlu0 %457, %v295
        %v459 = vpop.permute.xlu0 %458
        %v461 = vmul.f32 %v459, %v297
        %462 = vset.pattern.permute.xlu0 49
        %463 = vperm.xlu0 %462, %v295
        %v464 = vpop.permute.xlu0 %463
        %v466 = vmul.f32 %v464, %v297
        %468 = vrot.lane.b32.xlu0 %v466, 120
        %v469 = vpop.permute.xlu0 %468
        %v471 = vadd.f32 %v461, %v469
        %472 = vrot.lane.b32.xlu0 %v301, 32
        %v473 = vpop.permute.xlu0 %472
        %v475 = vmul.f32 %v471, %v473
        %477 = vrot.lane.b32.xlu0 %v475, 124
        %v478 = vpop.permute.xlu0 %477
        %v480 = vsub.f32 %v475, %v478
        %481 = vrot.lane.b32.xlu0 %v301, 28
        %v482 = vpop.permute.xlu0 %481
        %v484 = vmul.f32 %v471, %v482
        %485 = vrot.lane.b32.xlu0 %v301, 36
        %v486 = vpop.permute.xlu0 %485
        %v488 = vmul.f32 %v471, %v486
        %490 = vrot.lane.b32.xlu0 %v488, 124
        %v491 = vpop.permute.xlu0 %490
        %v493 = vadd.f32 %v484, %v491
        %495 = vrot.lane.b32.xlu0 %v480, 96
        %v496 = vpop.permute.xlu0 %495
        %499 = vrot.lane.b32.xlu0 %v493, 100
        %v500 = vpop.permute.xlu0 %499
        %v502 = vsel %vm455, %v496, %v500
        %503 = vset.pattern.permute.xlu0 56
        %504 = vperm.xlu0 %503, %v295
        %v505 = vpop.permute.xlu0 %504
        %v507 = vmul.f32 %v505, %v297
        %508 = vset.pattern.permute.xlu0 57
        %509 = vperm.xlu0 %508, %v295
        %v510 = vpop.permute.xlu0 %509
        %v512 = vmul.f32 %v510, %v297
        %514 = vrot.lane.b32.xlu0 %v512, 120
        %v515 = vpop.permute.xlu0 %514
        %v517 = vadd.f32 %v507, %v515
        %vm518 = vcmask 64512
        %v520 = vsel %vm518, %v456, 0
        %v523 = vsel %vm518, %v502, 0
        %525 = vmatprep.subr.mxu0 0.0
        %526 = vmatpush1.xpose.msra.mxu0 0.0
        %527 = vmatprep.subr.mxu0 0.0
        %528 = vmatpush1.xpose.msra.mxu0 0.0
        %529 = vmatprep.subr.mxu0 0.0
        %530 = vmatpush1.xpose.msra.mxu0 0.0
        %531 = vmatprep.subr.mxu0 0.0
        %532 = vmatpush1.xpose.msra.mxu0 0.0
        %533 = vmatprep.subr.mxu0 0.0
        %534 = vmatpush1.xpose.msra.mxu0 0.0
        %535 = vmatprep.subr.mxu0 0.0
        %536 = vmatpush1.xpose.msra.mxu0 0.0
        %537 = vmatprep.subr.mxu0 0.0
        %538 = vmatpush1.xpose.msra.mxu0 0.0
        %539 = vmatprep.subr.mxu0 0.0
        %540 = vmatpush1.xpose.msra.mxu0 0.0
        %541 = vmatprep.subr.mxu0 0.0
        %542 = vmatpush1.xpose.msra.mxu0 0.0
        %543 = vmatprep.subr.mxu0 0.0
        %544 = vmatpush1.xpose.msra.mxu0 0.0
        %545 = vmatprep.subr.mxu0 0.0
        %546 = vmatpush1.xpose.msra.mxu0 0.0
        %547 = vmatprep.subr.mxu0 0.0
        %548 = vmatpush1.xpose.msra.mxu0 0.0
        %549 = vmatprep.subr.mxu0 0.0
        %550 = vmatpush1.xpose.msra.mxu0 0.0
        %551 = vmatprep.subr.mxu0 0.0
        %552 = vmatpush1.xpose.msra.mxu0 0.0
        %553 = vmatprep.subr.mxu0 0.0
        %554 = vmatpush1.xpose.msra.mxu0 0.0
        %555 = vmatprep.subr.mxu0 0.0
        %556 = vmatpush1.xpose.msra.mxu0 %v523
        %557 = vmatprep.subr.mxu0 0.0
        %558 = vmatpush2.xpose.msra.mxu0 0.0
        %559 = vmatprep.subr.mxu0 0.0
        %560 = vmatpush2.xpose.msra.mxu0 0.0
        %561 = vmatprep.subr.mxu0 0.0
        %562 = vmatpush2.xpose.msra.mxu0 0.0
        %563 = vmatprep.subr.mxu0 0.0
        %564 = vmatpush2.xpose.msra.mxu0 0.0
        %565 = vmatprep.subr.mxu0 0.0
        %566 = vmatpush2.xpose.msra.mxu0 0.0
        %567 = vmatprep.subr.mxu0 0.0
        %568 = vmatpush2.xpose.msra.mxu0 0.0
        %569 = vmatprep.subr.mxu0 0.0
        %570 = vmatpush2.xpose.msra.mxu0 0.0
        %571 = vmatprep.subr.mxu0 0.0
        %572 = vmatpush2.xpose.msra.mxu0 0.0
        %573 = vmatprep.subr.mxu0 0.0
        %574 = vmatpush2.xpose.msra.mxu0 0.0
        %575 = vmatprep.subr.mxu0 0.0
        %576 = vmatpush2.xpose.msra.mxu0 0.0
        %577 = vmatprep.subr.mxu0 0.0
        %578 = vmatpush2.xpose.msra.mxu0 0.0
        %579 = vmatprep.subr.mxu0 0.0
        %580 = vmatpush2.xpose.msra.mxu0 0.0
        %581 = vmatprep.subr.mxu0 0.0
        %582 = vmatpush2.xpose.msra.mxu0 0.0
        %583 = vmatprep.subr.mxu0 0.0
        %584 = vmatpush2.xpose.msra.mxu0 0.0
        %585 = vmatprep.subr.mxu0 0.0
        %586 = vmatpush2.xpose.msra.mxu0 0.0
        %587 = vmatprep.subr.mxu0 0.0
        %588 = vmatpush2.xpose.msra.mxu0 0.0
        %589 = vmatprep.mubr.f32.mxu0 0.0
        %590 = vmatmul.mubr.f32.gmra.mxu0 %v520
        %v591 = vpop.f32.mrf.mxu0
        %v592 = vadd.f32 %v307, %v591
        %v593 = vpop.f32.mrf.mxu0
        %594 = vdwg.mxu0
        %v595 = vsel %vm518, %v592, -inf
        %596 = vmax.xlane.f32.xlu0 %v595
        %v597 = vpop.xlane.xlu0 %596
        %v598 = vsub.f32 %v592, %v597
        %v599 = vmul.f32 %v598, 1.442695
        %v600 = vpow.pop %v599
        %v601 = vsel %vm518, %v600, 0.0
        %602 = vadd.xlane.f32.xlu0 %v601
        %v603 = vpop.xlane.xlu0 %602
        %v604 = vrcp.pop %v603
        %v605 = vmul.f32 %v600, %v604
        %607 = vrot.lane.b32.xlu0 %v517, 80
        %v608 = vpop.permute.xlu0 %607
        %v611 = vsel %vm518, %v605, 0
        %613 = vmatprep.subr.mxu0 0.0
        %614 = vmatpush1.msra.mxu0 0.0
        %615 = vmatprep.subr.mxu0 0.0
        %616 = vmatpush1.msra.mxu0 0.0
        %617 = vmatprep.subr.mxu0 0.0
        %618 = vmatpush1.msra.mxu0 0.0
        %619 = vmatprep.subr.mxu0 0.0
        %620 = vmatpush1.msra.mxu0 0.0
        %621 = vmatprep.subr.mxu0 0.0
        %622 = vmatpush1.msra.mxu0 0.0
        %623 = vmatprep.subr.mxu0 0.0
        %624 = vmatpush1.msra.mxu0 0.0
        %625 = vmatprep.subr.mxu0 0.0
        %626 = vmatpush1.msra.mxu0 0.0
        %627 = vmatprep.subr.mxu0 0.0
        %628 = vmatpush1.msra.mxu0 0.0
        %629 = vmatprep.subr.mxu0 0.0
        %630 = vmatpush1.msra.mxu0 0.0
        %631 = vmatprep.subr.mxu0 0.0
        %632 = vmatpush1.msra.mxu0 0.0
        %633 = vmatprep.subr.mxu0 0.0
        %634 = vmatpush1.msra.mxu0 0.0
        %635 = vmatprep.subr.mxu0 0.0
        %636 = vmatpush1.msra.mxu0 0.0
        %637 = vmatprep.subr.mxu0 0.0
        %638 = vmatpush1.msra.mxu0 0.0
        %639 = vmatprep.subr.mxu0 0.0
        %640 = vmatpush1.msra.mxu0 0.0
        %641 = vmatprep.subr.mxu0 0.0
        %642 = vmatpush1.msra.mxu0 0.0
        %643 = vmatprep.subr.mxu0 0.0
        %644 = vmatpush1.msra.mxu0 %v608
        %645 = vmatprep.subr.mxu0 0.0
        %646 = vmatpush2.msra.mxu0 0.0
        %647 = vmatprep.subr.mxu0 0.0
        %648 = vmatpush2.msra.mxu0 0.0
        %649 = vmatprep.subr.mxu0 0.0
        %650 = vmatpush2.msra.mxu0 0.0
        %651 = vmatprep.subr.mxu0 0.0
        %652 = vmatpush2.msra.mxu0 0.0
        %653 = vmatprep.subr.mxu0 0.0
        %654 = vmatpush2.msra.mxu0 0.0
        %655 = vmatprep.subr.mxu0 0.0
        %656 = vmatpush2.msra.mxu0 0.0
        %657 = vmatprep.subr.mxu0 0.0
        %658 = vmatpush2.msra.mxu0 0.0
        %659 = vmatprep.subr.mxu0 0.0
        %660 = vmatpush2.msra.mxu0 0.0
        %661 = vmatprep.subr.mxu0 0.0
        %662 = vmatpush2.msra.mxu0 0.0
        %663 = vmatprep.subr.mxu0 0.0
        %664 = vmatpush2.msra.mxu0 0.0
        %665 = vmatprep.subr.mxu0 0.0
        %666 = vmatpush2.msra.mxu0 0.0
        %667 = vmatprep.subr.mxu0 0.0
        %668 = vmatpush2.msra.mxu0 0.0
        %669 = vmatprep.subr.mxu0 0.0
        %670 = vmatpush2.msra.mxu0 0.0
        %671 = vmatprep.subr.mxu0 0.0
        %672 = vmatpush2.msra.mxu0 0.0
        %673 = vmatprep.subr.mxu0 0.0
        %674 = vmatpush2.msra.mxu0 0.0
        %675 = vmatprep.subr.mxu0 0.0
        %676 = vmatpush2.msra.mxu0 0.0
        %677 = vmatprep.mubr.f32.mxu0 0.0
        %678 = vmatmul.mubr.f32.gmra.mxu0 %v611
        %v679 = vpop.f32.mrf.mxu0
        %v680 = vadd.f32 0.0, %v679
        %v681 = vpop.f32.mrf.mxu0
        %682 = vdwg.mxu0
        %683 = vset.pattern.permute.xlu0 12
        %684 = vperm.xlu0 %683, %v295
        %v685 = vpop.permute.xlu0 %684
        %v687 = vmul.f32 %v685, %v295
        %688 = vset.pattern.permute.xlu0 13
        %689 = vperm.xlu0 %688, %v295
        %v690 = vpop.permute.xlu0 %689
        %v692 = vmul.f32 %v690, %v295
        %694 = vrot.lane.b32.xlu0 %v692, 120
        %v695 = vpop.permute.xlu0 %694
        %v697 = vadd.f32 %v687, %v695
        %698 = vset.pattern.permute.xlu0 14
        %699 = vperm.xlu0 %698, %v295
        %v700 = vpop.permute.xlu0 %699
        %v702 = vmul.f32 %v700, %v295
        %704 = vrot.lane.b32.xlu0 %v702, 112
        %v705 = vpop.permute.xlu0 %704
        %v707 = vadd.f32 %v697, %v705
        %708 = vset.pattern.permute.xlu0 15
        %709 = vperm.xlu0 %708, %v295
        %v710 = vpop.permute.xlu0 %709
        %v712 = vmul.f32 %v710, %v295
        %714 = vrot.lane.b32.xlu0 %v712, 104
        %v715 = vpop.permute.xlu0 %714
        %v717 = vadd.f32 %v707, %v715
        %718 = vset.pattern.permute.xlu0 16
        %719 = vperm.xlu0 %718, %v295
        %v720 = vpop.permute.xlu0 %719
        %v722 = vmul.f32 %v720, %v295
        %724 = vrot.lane.b32.xlu0 %v722, 96
        %v725 = vpop.permute.xlu0 %724
        %v727 = vadd.f32 %v717, %v725
        %728 = vset.pattern.permute.xlu0 17
        %729 = vperm.xlu0 %728, %v295
        %v730 = vpop.permute.xlu0 %729
        %v732 = vmul.f32 %v730, %v295
        %734 = vrot.lane.b32.xlu0 %v732, 88
        %v735 = vpop.permute.xlu0 %734
        %v737 = vadd.f32 %v727, %v735
        %738 = vset.pattern.permute.xlu0 18
        %739 = vperm.xlu0 %738, %v295
        %v740 = vpop.permute.xlu0 %739
        %v742 = vmul.f32 %v740, %v295
        %744 = vrot.lane.b32.xlu0 %v742, 80
        %v745 = vpop.permute.xlu0 %744
        %v747 = vadd.f32 %v737, %v745
        %748 = vset.pattern.permute.xlu0 19
        %749 = vperm.xlu0 %748, %v295
        %v750 = vpop.permute.xlu0 %749
        %v752 = vmul.f32 %v750, %v295
        %754 = vrot.lane.b32.xlu0 %v752, 72
        %v755 = vpop.permute.xlu0 %754
        %v757 = vadd.f32 %v747, %v755
        %758 = vset.pattern.permute.xlu0 20
        %759 = vperm.xlu0 %758, %v295
        %v760 = vpop.permute.xlu0 %759
        %v762 = vmul.f32 %v760, %v297
        %764 = vrot.lane.b32.xlu0 %v762, 64
        %v765 = vpop.permute.xlu0 %764
        %v767 = vadd.f32 %v757, %v765
        %768 = vset.pattern.permute.xlu0 21
        %769 = vperm.xlu0 %768, %v295
        %v770 = vpop.permute.xlu0 %769
        %v772 = vmul.f32 %v770, %v297
        %774 = vrot.lane.b32.xlu0 %v772, 56
        %v775 = vpop.permute.xlu0 %774
        %v777 = vadd.f32 %v767, %v775
        %778 = vset.pattern.permute.xlu0 22
        %779 = vperm.xlu0 %778, %v295
        %v780 = vpop.permute.xlu0 %779
        %v782 = vmul.f32 %v780, %v297
        %784 = vrot.lane.b32.xlu0 %v782, 48
        %v785 = vpop.permute.xlu0 %784
        %v787 = vadd.f32 %v777, %v785
        %788 = vset.pattern.permute.xlu0 23
        %789 = vperm.xlu0 %788, %v295
        %v790 = vpop.permute.xlu0 %789
        %v792 = vmul.f32 %v790, %v297
        %794 = vrot.lane.b32.xlu0 %v792, 40
        %v795 = vpop.permute.xlu0 %794
        %v797 = vadd.f32 %v787, %v795
        %v798 = vmul.f32 %v797, %v426
        %800 = vrot.lane.b32.xlu0 %v798, 124
        %v801 = vpop.permute.xlu0 %800
        %v803 = vsub.f32 %v798, %v801
        %v804 = vmul.f32 %v797, %v435
        %v805 = vmul.f32 %v797, %v439
        %807 = vrot.lane.b32.xlu0 %v805, 124
        %v808 = vpop.permute.xlu0 %807
        %v810 = vadd.f32 %v804, %v808
        %812 = vrot.lane.b32.xlu0 %v803, 64
        %v813 = vpop.permute.xlu0 %812
        %816 = vrot.lane.b32.xlu0 %v810, 68
        %v817 = vpop.permute.xlu0 %816
        %v819 = vsel %vm455, %v813, %v817
        %820 = vset.pattern.permute.xlu0 50
        %821 = vperm.xlu0 %820, %v295
        %v822 = vpop.permute.xlu0 %821
        %v824 = vmul.f32 %v822, %v297
        %825 = vset.pattern.permute.xlu0 51
        %826 = vperm.xlu0 %825, %v295
        %v827 = vpop.permute.xlu0 %826
        %v829 = vmul.f32 %v827, %v297
        %831 = vrot.lane.b32.xlu0 %v829, 120
        %v832 = vpop.permute.xlu0 %831
        %v834 = vadd.f32 %v824, %v832
        %v835 = vmul.f32 %v834, %v473
        %837 = vrot.lane.b32.xlu0 %v835, 124
        %v838 = vpop.permute.xlu0 %837
        %v840 = vsub.f32 %v835, %v838
        %v841 = vmul.f32 %v834, %v482
        %v842 = vmul.f32 %v834, %v486
        %844 = vrot.lane.b32.xlu0 %v842, 124
        %v845 = vpop.permute.xlu0 %844
        %v847 = vadd.f32 %v841, %v845
        %849 = vrot.lane.b32.xlu0 %v840, 96
        %v850 = vpop.permute.xlu0 %849
        %853 = vrot.lane.b32.xlu0 %v847, 100
        %v854 = vpop.permute.xlu0 %853
        %v856 = vsel %vm455, %v850, %v854
        %857 = vset.pattern.permute.xlu0 58
        %858 = vperm.xlu0 %857, %v295
        %v859 = vpop.permute.xlu0 %858
        %v861 = vmul.f32 %v859, %v297
        %862 = vset.pattern.permute.xlu0 59
        %863 = vperm.xlu0 %862, %v295
        %v864 = vpop.permute.xlu0 %863
        %v866 = vmul.f32 %v864, %v297
        %868 = vrot.lane.b32.xlu0 %v866, 120
        %v869 = vpop.permute.xlu0 %868
        %v871 = vadd.f32 %v861, %v869
        %v873 = vsel %vm518, %v819, 0
        %v876 = vsel %vm518, %v856, 0
        %878 = vmatprep.subr.mxu0 0.0
        %879 = vmatpush1.xpose.msra.mxu0 0.0
        %880 = vmatprep.subr.mxu0 0.0
        %881 = vmatpush1.xpose.msra.mxu0 0.0
        %882 = vmatprep.subr.mxu0 0.0
        %883 = vmatpush1.xpose.msra.mxu0 0.0
        %884 = vmatprep.subr.mxu0 0.0
        %885 = vmatpush1.xpose.msra.mxu0 0.0
        %886 = vmatprep.subr.mxu0 0.0
        %887 = vmatpush1.xpose.msra.mxu0 0.0
        %888 = vmatprep.subr.mxu0 0.0
        %889 = vmatpush1.xpose.msra.mxu0 0.0
        %890 = vmatprep.subr.mxu0 0.0
        %891 = vmatpush1.xpose.msra.mxu0 0.0
        %892 = vmatprep.subr.mxu0 0.0
        %893 = vmatpush1.xpose.msra.mxu0 0.0
        %894 = vmatprep.subr.mxu0 0.0
        %895 = vmatpush1.xpose.msra.mxu0 0.0
        %896 = vmatprep.subr.mxu0 0.0
        %897 = vmatpush1.xpose.msra.mxu0 0.0
        %898 = vmatprep.subr.mxu0 0.0
        %899 = vmatpush1.xpose.msra.mxu0 0.0
        %900 = vmatprep.subr.mxu0 0.0
        %901 = vmatpush1.xpose.msra.mxu0 0.0
        %902 = vmatprep.subr.mxu0 0.0
        %903 = vmatpush1.xpose.msra.mxu0 0.0
        %904 = vmatprep.subr.mxu0 0.0
        %905 = vmatpush1.xpose.msra.mxu0 0.0
        %906 = vmatprep.subr.mxu0 0.0
        %907 = vmatpush1.xpose.msra.mxu0 0.0
        %908 = vmatprep.subr.mxu0 0.0
        %909 = vmatpush1.xpose.msra.mxu0 %v876
        %910 = vmatprep.subr.mxu0 0.0
        %911 = vmatpush2.xpose.msra.mxu0 0.0
        %912 = vmatprep.subr.mxu0 0.0
        %913 = vmatpush2.xpose.msra.mxu0 0.0
        %914 = vmatprep.subr.mxu0 0.0
        %915 = vmatpush2.xpose.msra.mxu0 0.0
        %916 = vmatprep.subr.mxu0 0.0
        %917 = vmatpush2.xpose.msra.mxu0 0.0
        %918 = vmatprep.subr.mxu0 0.0
        %919 = vmatpush2.xpose.msra.mxu0 0.0
        %920 = vmatprep.subr.mxu0 0.0
        %921 = vmatpush2.xpose.msra.mxu0 0.0
        %922 = vmatprep.subr.mxu0 0.0
        %923 = vmatpush2.xpose.msra.mxu0 0.0
        %924 = vmatprep.subr.mxu0 0.0
        %925 = vmatpush2.xpose.msra.mxu0 0.0
        %926 = vmatprep.subr.mxu0 0.0
        %927 = vmatpush2.xpose.msra.mxu0 0.0
        %928 = vmatprep.subr.mxu0 0.0
        %929 = vmatpush2.xpose.msra.mxu0 0.0
        %930 = vmatprep.subr.mxu0 0.0
        %931 = vmatpush2.xpose.msra.mxu0 0.0
        %932 = vmatprep.subr.mxu0 0.0
        %933 = vmatpush2.xpose.msra.mxu0 0.0
        %934 = vmatprep.subr.mxu0 0.0
        %935 = vmatpush2.xpose.msra.mxu0 0.0
        %936 = vmatprep.subr.mxu0 0.0
        %937 = vmatpush2.xpose.msra.mxu0 0.0
        %938 = vmatprep.subr.mxu0 0.0
        %939 = vmatpush2.xpose.msra.mxu0 0.0
        %940 = vmatprep.subr.mxu0 0.0
        %941 = vmatpush2.xpose.msra.mxu0 0.0
        %942 = vmatprep.mubr.f32.mxu0 0.0
        %943 = vmatmul.mubr.f32.gmra.mxu0 %v873
        %v944 = vpop.f32.mrf.mxu0
        %v945 = vadd.f32 %v307, %v944
        %v946 = vpop.f32.mrf.mxu0
        %947 = vdwg.mxu0
        %v948 = vsel %vm518, %v945, -inf
        %949 = vmax.xlane.f32.xlu0 %v948
        %v950 = vpop.xlane.xlu0 %949
        %v951 = vsub.f32 %v945, %v950
        %v952 = vmul.f32 %v951, 1.442695
        %v953 = vpow.pop %v952
        %v954 = vsel %vm518, %v953, 0.0
        %955 = vadd.xlane.f32.xlu0 %v954
        %v956 = vpop.xlane.xlu0 %955
        %v957 = vrcp.pop %v956
        %v958 = vmul.f32 %v953, %v957
        %960 = vrot.lane.b32.xlu0 %v871, 80
        %v961 = vpop.permute.xlu0 %960
        %v964 = vsel %vm518, %v958, 0
        %966 = vmatprep.subr.mxu0 0.0
        %967 = vmatpush1.msra.mxu0 0.0
        %968 = vmatprep.subr.mxu0 0.0
        %969 = vmatpush1.msra.mxu0 0.0
        %970 = vmatprep.subr.mxu0 0.0
        %971 = vmatpush1.msra.mxu0 0.0
        %972 = vmatprep.subr.mxu0 0.0
        %973 = vmatpush1.msra.mxu0 0.0
        %974 = vmatprep.subr.mxu0 0.0
        %975 = vmatpush1.msra.mxu0 0.0
        %976 = vmatprep.subr.mxu0 0.0
        %977 = vmatpush1.msra.mxu0 0.0
        %978 = vmatprep.subr.mxu0 0.0
        %979 = vmatpush1.msra.mxu0 0.0
        %980 = vmatprep.subr.mxu0 0.0
        %981 = vmatpush1.msra.mxu0 0.0
        %982 = vmatprep.subr.mxu0 0.0
        %983 = vmatpush1.msra.mxu0 0.0
        %984 = vmatprep.subr.mxu0 0.0
        %985 = vmatpush1.msra.mxu0 0.0
        %986 = vmatprep.subr.mxu0 0.0
        %987 = vmatpush1.msra.mxu0 0.0
        %988 = vmatprep.subr.mxu0 0.0
        %989 = vmatpush1.msra.mxu0 0.0
        %990 = vmatprep.subr.mxu0 0.0
        %991 = vmatpush1.msra.mxu0 0.0
        %992 = vmatprep.subr.mxu0 0.0
        %993 = vmatpush1.msra.mxu0 0.0
        %994 = vmatprep.subr.mxu0 0.0
        %995 = vmatpush1.msra.mxu0 0.0
        %996 = vmatprep.subr.mxu0 0.0
        %997 = vmatpush1.msra.mxu0 %v961
        %998 = vmatprep.subr.mxu0 0.0
        %999 = vmatpush2.msra.mxu0 0.0
        %1000 = vmatprep.subr.mxu0 0.0
        %1001 = vmatpush2.msra.mxu0 0.0
        %1002 = vmatprep.subr.mxu0 0.0
        %1003 = vmatpush2.msra.mxu0 0.0
        %1004 = vmatprep.subr.mxu0 0.0
        %1005 = vmatpush2.msra.mxu0 0.0
        %1006 = vmatprep.subr.mxu0 0.0
        %1007 = vmatpush2.msra.mxu0 0.0
        %1008 = vmatprep.subr.mxu0 0.0
        %1009 = vmatpush2.msra.mxu0 0.0
        %1010 = vmatprep.subr.mxu0 0.0
        %1011 = vmatpush2.msra.mxu0 0.0
        %1012 = vmatprep.subr.mxu0 0.0
        %1013 = vmatpush2.msra.mxu0 0.0
        %1014 = vmatprep.subr.mxu0 0.0
        %1015 = vmatpush2.msra.mxu0 0.0
        %1016 = vmatprep.subr.mxu0 0.0
        %1017 = vmatpush2.msra.mxu0 0.0
        %1018 = vmatprep.subr.mxu0 0.0
        %1019 = vmatpush2.msra.mxu0 0.0
        %1020 = vmatprep.subr.mxu0 0.0
        %1021 = vmatpush2.msra.mxu0 0.0
        %1022 = vmatprep.subr.mxu0 0.0
        %1023 = vmatpush2.msra.mxu0 0.0
        %1024 = vmatprep.subr.mxu0 0.0
        %1025 = vmatpush2.msra.mxu0 0.0
        %1026 = vmatprep.subr.mxu0 0.0
        %1027 = vmatpush2.msra.mxu0 0.0
        %1028 = vmatprep.subr.mxu0 0.0
        %1029 = vmatpush2.msra.mxu0 0.0
        %1030 = vmatprep.mubr.f32.mxu0 0.0
        %1031 = vmatmul.mubr.f32.gmra.mxu0 %v964
        %v1032 = vpop.f32.mrf.mxu0
        %v1033 = vadd.f32 0.0, %v1032
        %v1034 = vpop.f32.mrf.mxu0
        %1035 = vdwg.mxu0
        %1036 = vset.pattern.permute.xlu0 24
        %1037 = vperm.xlu0 %1036, %v295
        %v1038 = vpop.permute.xlu0 %1037
        %v1040 = vmul.f32 %v1038, %v295
        %1041 = vset.pattern.permute.xlu0 25
        %1042 = vperm.xlu0 %1041, %v295
        %v1043 = vpop.permute.xlu0 %1042
        %v1045 = vmul.f32 %v1043, %v295
        %1047 = vrot.lane.b32.xlu0 %v1045, 120
        %v1048 = vpop.permute.xlu0 %1047
        %v1050 = vadd.f32 %v1040, %v1048
        %1051 = vset.pattern.permute.xlu0 26
        %1052 = vperm.xlu0 %1051, %v295
        %v1053 = vpop.permute.xlu0 %1052
        %v1055 = vmul.f32 %v1053, %v295
        %1057 = vrot.lane.b32.xlu0 %v1055, 112
        %v1058 = vpop.permute.xlu0 %1057
        %v1060 = vadd.f32 %v1050, %v1058
        %1061 = vset.pattern.permute.xlu0 27
        %1062 = vperm.xlu0 %1061, %v295
        %v1063 = vpop.permute.xlu0 %1062
        %v1065 = vmul.f32 %v1063, %v295
        %1067 = vrot.lane.b32.xlu0 %v1065, 104
        %v1068 = vpop.permute.xlu0 %1067
        %v1070 = vadd.f32 %v1060, %v1068
        %1071 = vset.pattern.permute.xlu0 28
        %1072 = vperm.xlu0 %1071, %v295
        %v1073 = vpop.permute.xlu0 %1072
        %v1075 = vmul.f32 %v1073, %v295
        %1077 = vrot.lane.b32.xlu0 %v1075, 96
        %v1078 = vpop.permute.xlu0 %1077
        %v1080 = vadd.f32 %v1070, %v1078
        %1081 = vset.pattern.permute.xlu0 29
        %1082 = vperm.xlu0 %1081, %v295
        %v1083 = vpop.permute.xlu0 %1082
        %v1085 = vmul.f32 %v1083, %v295
        %1087 = vrot.lane.b32.xlu0 %v1085, 88
        %v1088 = vpop.permute.xlu0 %1087
        %v1090 = vadd.f32 %v1080, %v1088
        %1091 = vset.pattern.permute.xlu0 30
        %1092 = vperm.xlu0 %1091, %v295
        %v1093 = vpop.permute.xlu0 %1092
        %v1095 = vmul.f32 %v1093, %v295
        %1097 = vrot.lane.b32.xlu0 %v1095, 80
        %v1098 = vpop.permute.xlu0 %1097
        %v1100 = vadd.f32 %v1090, %v1098
        %1101 = vset.pattern.permute.xlu0 31
        %1102 = vperm.xlu0 %1101, %v295
        %v1103 = vpop.permute.xlu0 %1102
        %v1105 = vmul.f32 %v1103, %v295
        %1107 = vrot.lane.b32.xlu0 %v1105, 72
        %v1108 = vpop.permute.xlu0 %1107
        %v1110 = vadd.f32 %v1100, %v1108
        %1111 = vset.pattern.permute.xlu0 32
        %1112 = vperm.xlu0 %1111, %v295
        %v1113 = vpop.permute.xlu0 %1112
        %v1115 = vmul.f32 %v1113, %v297
        %1117 = vrot.lane.b32.xlu0 %v1115, 64
        %v1118 = vpop.permute.xlu0 %1117
        %v1120 = vadd.f32 %v1110, %v1118
        %1121 = vset.pattern.permute.xlu0 33
        %1122 = vperm.xlu0 %1121, %v295
        %v1123 = vpop.permute.xlu0 %1122
        %v1125 = vmul.f32 %v1123, %v297
        %1127 = vrot.lane.b32.xlu0 %v1125, 56
        %v1128 = vpop.permute.xlu0 %1127
        %v1130 = vadd.f32 %v1120, %v1128
        %1131 = vset.pattern.permute.xlu0 34
        %1132 = vperm.xlu0 %1131, %v295
        %v1133 = vpop.permute.xlu0 %1132
        %v1135 = vmul.f32 %v1133, %v297
        %1137 = vrot.lane.b32.xlu0 %v1135, 48
        %v1138 = vpop.permute.xlu0 %1137
        %v1140 = vadd.f32 %v1130, %v1138
        %1141 = vset.pattern.permute.xlu0 35
        %1142 = vperm.xlu0 %1141, %v295
        %v1143 = vpop.permute.xlu0 %1142
        %v1145 = vmul.f32 %v1143, %v297
        %1147 = vrot.lane.b32.xlu0 %v1145, 40
        %v1148 = vpop.permute.xlu0 %1147
        %v1150 = vadd.f32 %v1140, %v1148
        %v1151 = vmul.f32 %v1150, %v426
        %1153 = vrot.lane.b32.xlu0 %v1151, 124
        %v1154 = vpop.permute.xlu0 %1153
        %v1156 = vsub.f32 %v1151, %v1154
        %v1157 = vmul.f32 %v1150, %v435
        %v1158 = vmul.f32 %v1150, %v439
        %1160 = vrot.lane.b32.xlu0 %v1158, 124
        %v1161 = vpop.permute.xlu0 %1160
        %v1163 = vadd.f32 %v1157, %v1161
        %1165 = vrot.lane.b32.xlu0 %v1156, 64
        %v1166 = vpop.permute.xlu0 %1165
        %1169 = vrot.lane.b32.xlu0 %v1163, 68
        %v1170 = vpop.permute.xlu0 %1169
        %v1172 = vsel %vm455, %v1166, %v1170
        %1173 = vset.pattern.permute.xlu0 52
        %1174 = vperm.xlu0 %1173, %v295
        %v1175 = vpop.permute.xlu0 %1174
        %v1177 = vmul.f32 %v1175, %v297
        %1178 = vset.pattern.permute.xlu0 53
        %1179 = vperm.xlu0 %1178, %v295
        %v1180 = vpop.permute.xlu0 %1179
        %v1182 = vmul.f32 %v1180, %v297
        %1184 = vrot.lane.b32.xlu0 %v1182, 120
        %v1185 = vpop.permute.xlu0 %1184
        %v1187 = vadd.f32 %v1177, %v1185
        %v1188 = vmul.f32 %v1187, %v473
        %1190 = vrot.lane.b32.xlu0 %v1188, 124
        %v1191 = vpop.permute.xlu0 %1190
        %v1193 = vsub.f32 %v1188, %v1191
        %v1194 = vmul.f32 %v1187, %v482
        %v1195 = vmul.f32 %v1187, %v486
        %1197 = vrot.lane.b32.xlu0 %v1195, 124
        %v1198 = vpop.permute.xlu0 %1197
        %v1200 = vadd.f32 %v1194, %v1198
        %1202 = vrot.lane.b32.xlu0 %v1193, 96
        %v1203 = vpop.permute.xlu0 %1202
        %1206 = vrot.lane.b32.xlu0 %v1200, 100
        %v1207 = vpop.permute.xlu0 %1206
        %v1209 = vsel %vm455, %v1203, %v1207
        %1210 = vset.pattern.permute.xlu0 60
        %1211 = vperm.xlu0 %1210, %v295
        %v1212 = vpop.permute.xlu0 %1211
        %v1214 = vmul.f32 %v1212, %v297
        %1215 = vset.pattern.permute.xlu0 61
        %1216 = vperm.xlu0 %1215, %v295
        %v1217 = vpop.permute.xlu0 %1216
        %v1219 = vmul.f32 %v1217, %v297
        %1221 = vrot.lane.b32.xlu0 %v1219, 120
        %v1222 = vpop.permute.xlu0 %1221
        %v1224 = vadd.f32 %v1214, %v1222
        %v1226 = vsel %vm518, %v1172, 0
        %v1229 = vsel %vm518, %v1209, 0
        %1231 = vmatprep.subr.mxu0 0.0
        %1232 = vmatpush1.xpose.msra.mxu0 0.0
        %1233 = vmatprep.subr.mxu0 0.0
        %1234 = vmatpush1.xpose.msra.mxu0 0.0
        %1235 = vmatprep.subr.mxu0 0.0
        %1236 = vmatpush1.xpose.msra.mxu0 0.0
        %1237 = vmatprep.subr.mxu0 0.0
        %1238 = vmatpush1.xpose.msra.mxu0 0.0
        %1239 = vmatprep.subr.mxu0 0.0
        %1240 = vmatpush1.xpose.msra.mxu0 0.0
        %1241 = vmatprep.subr.mxu0 0.0
        %1242 = vmatpush1.xpose.msra.mxu0 0.0
        %1243 = vmatprep.subr.mxu0 0.0
        %1244 = vmatpush1.xpose.msra.mxu0 0.0
        %1245 = vmatprep.subr.mxu0 0.0
        %1246 = vmatpush1.xpose.msra.mxu0 0.0
        %1247 = vmatprep.subr.mxu0 0.0
        %1248 = vmatpush1.xpose.msra.mxu0 0.0
        %1249 = vmatprep.subr.mxu0 0.0
        %1250 = vmatpush1.xpose.msra.mxu0 0.0
        %1251 = vmatprep.subr.mxu0 0.0
        %1252 = vmatpush1.xpose.msra.mxu0 0.0
        %1253 = vmatprep.subr.mxu0 0.0
        %1254 = vmatpush1.xpose.msra.mxu0 0.0
        %1255 = vmatprep.subr.mxu0 0.0
        %1256 = vmatpush1.xpose.msra.mxu0 0.0
        %1257 = vmatprep.subr.mxu0 0.0
        %1258 = vmatpush1.xpose.msra.mxu0 0.0
        %1259 = vmatprep.subr.mxu0 0.0
        %1260 = vmatpush1.xpose.msra.mxu0 0.0
        %1261 = vmatprep.subr.mxu0 0.0
        %1262 = vmatpush1.xpose.msra.mxu0 %v1229
        %1263 = vmatprep.subr.mxu0 0.0
        %1264 = vmatpush2.xpose.msra.mxu0 0.0
        %1265 = vmatprep.subr.mxu0 0.0
        %1266 = vmatpush2.xpose.msra.mxu0 0.0
        %1267 = vmatprep.subr.mxu0 0.0
        %1268 = vmatpush2.xpose.msra.mxu0 0.0
        %1269 = vmatprep.subr.mxu0 0.0
        %1270 = vmatpush2.xpose.msra.mxu0 0.0
        %1271 = vmatprep.subr.mxu0 0.0
        %1272 = vmatpush2.xpose.msra.mxu0 0.0
        %1273 = vmatprep.subr.mxu0 0.0
        %1274 = vmatpush2.xpose.msra.mxu0 0.0
        %1275 = vmatprep.subr.mxu0 0.0
        %1276 = vmatpush2.xpose.msra.mxu0 0.0
        %1277 = vmatprep.subr.mxu0 0.0
        %1278 = vmatpush2.xpose.msra.mxu0 0.0
        %1279 = vmatprep.subr.mxu0 0.0
        %1280 = vmatpush2.xpose.msra.mxu0 0.0
        %1281 = vmatprep.subr.mxu0 0.0
        %1282 = vmatpush2.xpose.msra.mxu0 0.0
        %1283 = vmatprep.subr.mxu0 0.0
        %1284 = vmatpush2.xpose.msra.mxu0 0.0
        %1285 = vmatprep.subr.mxu0 0.0
        %1286 = vmatpush2.xpose.msra.mxu0 0.0
        %1287 = vmatprep.subr.mxu0 0.0
        %1288 = vmatpush2.xpose.msra.mxu0 0.0
        %1289 = vmatprep.subr.mxu0 0.0
        %1290 = vmatpush2.xpose.msra.mxu0 0.0
        %1291 = vmatprep.subr.mxu0 0.0
        %1292 = vmatpush2.xpose.msra.mxu0 0.0
        %1293 = vmatprep.subr.mxu0 0.0
        %1294 = vmatpush2.xpose.msra.mxu0 0.0
        %1295 = vmatprep.mubr.f32.mxu0 0.0
        %1296 = vmatmul.mubr.f32.gmra.mxu0 %v1226
        %v1297 = vpop.f32.mrf.mxu0
        %v1298 = vadd.f32 %v307, %v1297
        %v1299 = vpop.f32.mrf.mxu0
        %1300 = vdwg.mxu0
        %v1301 = vsel %vm518, %v1298, -inf
        %1302 = vmax.xlane.f32.xlu0 %v1301
        %v1303 = vpop.xlane.xlu0 %1302
        %v1304 = vsub.f32 %v1298, %v1303
        %v1305 = vmul.f32 %v1304, 1.442695
        %v1306 = vpow.pop %v1305
        %v1307 = vsel %vm518, %v1306, 0.0
        %1308 = vadd.xlane.f32.xlu0 %v1307
        %v1309 = vpop.xlane.xlu0 %1308
        %v1310 = vrcp.pop %v1309
        %v1311 = vmul.f32 %v1306, %v1310
        %1313 = vrot.lane.b32.xlu0 %v1224, 80
        %v1314 = vpop.permute.xlu0 %1313
        %v1317 = vsel %vm518, %v1311, 0
        %1319 = vmatprep.subr.mxu0 0.0
        %1320 = vmatpush1.msra.mxu0 0.0
        %1321 = vmatprep.subr.mxu0 0.0
        %1322 = vmatpush1.msra.mxu0 0.0
        %1323 = vmatprep.subr.mxu0 0.0
        %1324 = vmatpush1.msra.mxu0 0.0
        %1325 = vmatprep.subr.mxu0 0.0
        %1326 = vmatpush1.msra.mxu0 0.0
        %1327 = vmatprep.subr.mxu0 0.0
        %1328 = vmatpush1.msra.mxu0 0.0
        %1329 = vmatprep.subr.mxu0 0.0
        %1330 = vmatpush1.msra.mxu0 0.0
        %1331 = vmatprep.subr.mxu0 0.0
        %1332 = vmatpush1.msra.mxu0 0.0
        %1333 = vmatprep.subr.mxu0 0.0
        %1334 = vmatpush1.msra.mxu0 0.0
        %1335 = vmatprep.subr.mxu0 0.0
        %1336 = vmatpush1.msra.mxu0 0.0
        %1337 = vmatprep.subr.mxu0 0.0
        %1338 = vmatpush1.msra.mxu0 0.0
        %1339 = vmatprep.subr.mxu0 0.0
        %1340 = vmatpush1.msra.mxu0 0.0
        %1341 = vmatprep.subr.mxu0 0.0
        %1342 = vmatpush1.msra.mxu0 0.0
        %1343 = vmatprep.subr.mxu0 0.0
        %1344 = vmatpush1.msra.mxu0 0.0
        %1345 = vmatprep.subr.mxu0 0.0
        %1346 = vmatpush1.msra.mxu0 0.0
        %1347 = vmatprep.subr.mxu0 0.0
        %1348 = vmatpush1.msra.mxu0 0.0
        %1349 = vmatprep.subr.mxu0 0.0
        %1350 = vmatpush1.msra.mxu0 %v1314
        %1351 = vmatprep.subr.mxu0 0.0
        %1352 = vmatpush2.msra.mxu0 0.0
        %1353 = vmatprep.subr.mxu0 0.0
        %1354 = vmatpush2.msra.mxu0 0.0
        %1355 = vmatprep.subr.mxu0 0.0
        %1356 = vmatpush2.msra.mxu0 0.0
        %1357 = vmatprep.subr.mxu0 0.0
        %1358 = vmatpush2.msra.mxu0 0.0
        %1359 = vmatprep.subr.mxu0 0.0
        %1360 = vmatpush2.msra.mxu0 0.0
        %1361 = vmatprep.subr.mxu0 0.0
        %1362 = vmatpush2.msra.mxu0 0.0
        %1363 = vmatprep.subr.mxu0 0.0
        %1364 = vmatpush2.msra.mxu0 0.0
        %1365 = vmatprep.subr.mxu0 0.0
        %1366 = vmatpush2.msra.mxu0 0.0
        %1367 = vmatprep.subr.mxu0 0.0
        %1368 = vmatpush2.msra.mxu0 0.0
        %1369 = vmatprep.subr.mxu0 0.0
        %1370 = vmatpush2.msra.mxu0 0.0
        %1371 = vmatprep.subr.mxu0 0.0
        %1372 = vmatpush2.msra.mxu0 0.0
        %1373 = vmatprep.subr.mxu0 0.0
        %1374 = vmatpush2.msra.mxu0 0.0
        %1375 = vmatprep.subr.mxu0 0.0
        %1376 = vmatpush2.msra.mxu0 0.0
        %1377 = vmatprep.subr.mxu0 0.0
        %1378 = vmatpush2.msra.mxu0 0.0
        %1379 = vmatprep.subr.mxu0 0.0
        %1380 = vmatpush2.msra.mxu0 0.0
        %1381 = vmatprep.subr.mxu0 0.0
        %1382 = vmatpush2.msra.mxu0 0.0
        %1383 = vmatprep.mubr.f32.mxu0 0.0
        %1384 = vmatmul.mubr.f32.gmra.mxu0 %v1317
        %v1385 = vpop.f32.mrf.mxu0
        %v1386 = vadd.f32 0.0, %v1385
        %v1387 = vpop.f32.mrf.mxu0
        %1388 = vdwg.mxu0
        %1389 = vset.pattern.permute.xlu0 36
        %1390 = vperm.xlu0 %1389, %v295
        %v1391 = vpop.permute.xlu0 %1390
        %v1393 = vmul.f32 %v1391, %v295
        %1394 = vset.pattern.permute.xlu0 37
        %1395 = vperm.xlu0 %1394, %v295
        %v1396 = vpop.permute.xlu0 %1395
        %v1398 = vmul.f32 %v1396, %v295
        %1400 = vrot.lane.b32.xlu0 %v1398, 120
        %v1401 = vpop.permute.xlu0 %1400
        %v1403 = vadd.f32 %v1393, %v1401
        %1404 = vset.pattern.permute.xlu0 38
        %1405 = vperm.xlu0 %1404, %v295
        %v1406 = vpop.permute.xlu0 %1405
        %v1408 = vmul.f32 %v1406, %v295
        %1410 = vrot.lane.b32.xlu0 %v1408, 112
        %v1411 = vpop.permute.xlu0 %1410
        %v1413 = vadd.f32 %v1403, %v1411
        %1414 = vset.pattern.permute.xlu0 39
        %1415 = vperm.xlu0 %1414, %v295
        %v1416 = vpop.permute.xlu0 %1415
        %v1418 = vmul.f32 %v1416, %v295
        %1420 = vrot.lane.b32.xlu0 %v1418, 104
        %v1421 = vpop.permute.xlu0 %1420
        %v1423 = vadd.f32 %v1413, %v1421
        %1424 = vset.pattern.permute.xlu0 40
        %1425 = vperm.xlu0 %1424, %v295
        %v1426 = vpop.permute.xlu0 %1425
        %v1428 = vmul.f32 %v1426, %v295
        %1430 = vrot.lane.b32.xlu0 %v1428, 96
        %v1431 = vpop.permute.xlu0 %1430
        %v1433 = vadd.f32 %v1423, %v1431
        %1434 = vset.pattern.permute.xlu0 41
        %1435 = vperm.xlu0 %1434, %v295
        %v1436 = vpop.permute.xlu0 %1435
        %v1438 = vmul.f32 %v1436, %v295
        %1440 = vrot.lane.b32.xlu0 %v1438, 88
        %v1441 = vpop.permute.xlu0 %1440
        %v1443 = vadd.f32 %v1433, %v1441
        %1444 = vset.pattern.permute.xlu0 42
        %1445 = vperm.xlu0 %1444, %v295
        %v1446 = vpop.permute.xlu0 %1445
        %v1448 = vmul.f32 %v1446, %v295
        %1450 = vrot.lane.b32.xlu0 %v1448, 80
        %v1451 = vpop.permute.xlu0 %1450
        %v1453 = vadd.f32 %v1443, %v1451
        %1454 = vset.pattern.permute.xlu0 43
        %1455 = vperm.xlu0 %1454, %v295
        %v1456 = vpop.permute.xlu0 %1455
        %v1458 = vmul.f32 %v1456, %v295
        %1460 = vrot.lane.b32.xlu0 %v1458, 72
        %v1461 = vpop.permute.xlu0 %1460
        %v1463 = vadd.f32 %v1453, %v1461
        %1464 = vset.pattern.permute.xlu0 44
        %1465 = vperm.xlu0 %1464, %v295
        %v1466 = vpop.permute.xlu0 %1465
        %v1468 = vmul.f32 %v1466, %v297
        %1470 = vrot.lane.b32.xlu0 %v1468, 64
        %v1471 = vpop.permute.xlu0 %1470
        %v1473 = vadd.f32 %v1463, %v1471
        %1474 = vset.pattern.permute.xlu0 45
        %1475 = vperm.xlu0 %1474, %v295
        %v1476 = vpop.permute.xlu0 %1475
        %v1478 = vmul.f32 %v1476, %v297
        %1480 = vrot.lane.b32.xlu0 %v1478, 56
        %v1481 = vpop.permute.xlu0 %1480
        %v1483 = vadd.f32 %v1473, %v1481
        %1484 = vset.pattern.permute.xlu0 46
        %1485 = vperm.xlu0 %1484, %v295
        %v1486 = vpop.permute.xlu0 %1485
        %v1488 = vmul.f32 %v1486, %v297
        %1490 = vrot.lane.b32.xlu0 %v1488, 48
        %v1491 = vpop.permute.xlu0 %1490
        %v1493 = vadd.f32 %v1483, %v1491
        %1494 = vset.pattern.permute.xlu0 47
        %1495 = vperm.xlu0 %1494, %v295
        %v1496 = vpop.permute.xlu0 %1495
        %v1498 = vmul.f32 %v1496, %v297
        %1500 = vrot.lane.b32.xlu0 %v1498, 40
        %v1501 = vpop.permute.xlu0 %1500
        %v1503 = vadd.f32 %v1493, %v1501
        %v1504 = vmul.f32 %v1503, %v426
        %1506 = vrot.lane.b32.xlu0 %v1504, 124
        %v1507 = vpop.permute.xlu0 %1506
        %v1509 = vsub.f32 %v1504, %v1507
        %v1510 = vmul.f32 %v1503, %v435
        %v1511 = vmul.f32 %v1503, %v439
        %1513 = vrot.lane.b32.xlu0 %v1511, 124
        %v1514 = vpop.permute.xlu0 %1513
        %v1516 = vadd.f32 %v1510, %v1514
        %1518 = vrot.lane.b32.xlu0 %v1509, 64
        %v1519 = vpop.permute.xlu0 %1518
        %1522 = vrot.lane.b32.xlu0 %v1516, 68
        %v1523 = vpop.permute.xlu0 %1522
        %v1525 = vsel %vm455, %v1519, %v1523
        %1526 = vset.pattern.permute.xlu0 54
        %1527 = vperm.xlu0 %1526, %v295
        %v1528 = vpop.permute.xlu0 %1527
        %v1530 = vmul.f32 %v1528, %v297
        %1531 = vset.pattern.permute.xlu0 55
        %1532 = vperm.xlu0 %1531, %v295
        %v1533 = vpop.permute.xlu0 %1532
        %v1535 = vmul.f32 %v1533, %v297
        %1537 = vrot.lane.b32.xlu0 %v1535, 120
        %v1538 = vpop.permute.xlu0 %1537
        %v1540 = vadd.f32 %v1530, %v1538
        %v1541 = vmul.f32 %v1540, %v473
        %1543 = vrot.lane.b32.xlu0 %v1541, 124
        %v1544 = vpop.permute.xlu0 %1543
        %v1546 = vsub.f32 %v1541, %v1544
        %v1547 = vmul.f32 %v1540, %v482
        %v1548 = vmul.f32 %v1540, %v486
        %1550 = vrot.lane.b32.xlu0 %v1548, 124
        %v1551 = vpop.permute.xlu0 %1550
        %v1553 = vadd.f32 %v1547, %v1551
        %1555 = vrot.lane.b32.xlu0 %v1546, 96
        %v1556 = vpop.permute.xlu0 %1555
        %1559 = vrot.lane.b32.xlu0 %v1553, 100
        %v1560 = vpop.permute.xlu0 %1559
        %v1562 = vsel %vm455, %v1556, %v1560
        %1563 = vset.pattern.permute.xlu0 62
        %1564 = vperm.xlu0 %1563, %v295
        %v1565 = vpop.permute.xlu0 %1564
        %v1567 = vmul.f32 %v1565, %v297
        %1568 = vset.pattern.permute.xlu0 63
        %1569 = vperm.xlu0 %1568, %v295
        %v1570 = vpop.permute.xlu0 %1569
        %v1572 = vmul.f32 %v1570, %v297
        %1574 = vrot.lane.b32.xlu0 %v1572, 120
        %v1575 = vpop.permute.xlu0 %1574
        %v1577 = vadd.f32 %v1567, %v1575
        %v1579 = vsel %vm518, %v1525, 0
        %v1582 = vsel %vm518, %v1562, 0
        %1584 = vmatprep.subr.mxu0 0.0
        %1585 = vmatpush1.xpose.msra.mxu0 0.0
        %1586 = vmatprep.subr.mxu0 0.0
        %1587 = vmatpush1.xpose.msra.mxu0 0.0
        %1588 = vmatprep.subr.mxu0 0.0
        %1589 = vmatpush1.xpose.msra.mxu0 0.0
        %1590 = vmatprep.subr.mxu0 0.0
        %1591 = vmatpush1.xpose.msra.mxu0 0.0
        %1592 = vmatprep.subr.mxu0 0.0
        %1593 = vmatpush1.xpose.msra.mxu0 0.0
        %1594 = vmatprep.subr.mxu0 0.0
        %1595 = vmatpush1.xpose.msra.mxu0 0.0
        %1596 = vmatprep.subr.mxu0 0.0
        %1597 = vmatpush1.xpose.msra.mxu0 0.0
        %1598 = vmatprep.subr.mxu0 0.0
        %1599 = vmatpush1.xpose.msra.mxu0 0.0
        %1600 = vmatprep.subr.mxu0 0.0
        %1601 = vmatpush1.xpose.msra.mxu0 0.0
        %1602 = vmatprep.subr.mxu0 0.0
        %1603 = vmatpush1.xpose.msra.mxu0 0.0
        %1604 = vmatprep.subr.mxu0 0.0
        %1605 = vmatpush1.xpose.msra.mxu0 0.0
        %1606 = vmatprep.subr.mxu0 0.0
        %1607 = vmatpush1.xpose.msra.mxu0 0.0
        %1608 = vmatprep.subr.mxu0 0.0
        %1609 = vmatpush1.xpose.msra.mxu0 0.0
        %1610 = vmatprep.subr.mxu0 0.0
        %1611 = vmatpush1.xpose.msra.mxu0 0.0
        %1612 = vmatprep.subr.mxu0 0.0
        %1613 = vmatpush1.xpose.msra.mxu0 0.0
        %1614 = vmatprep.subr.mxu0 0.0
        %1615 = vmatpush1.xpose.msra.mxu0 %v1582
        %1616 = vmatprep.subr.mxu0 0.0
        %1617 = vmatpush2.xpose.msra.mxu0 0.0
        %1618 = vmatprep.subr.mxu0 0.0
        %1619 = vmatpush2.xpose.msra.mxu0 0.0
        %1620 = vmatprep.subr.mxu0 0.0
        %1621 = vmatpush2.xpose.msra.mxu0 0.0
        %1622 = vmatprep.subr.mxu0 0.0
        %1623 = vmatpush2.xpose.msra.mxu0 0.0
        %1624 = vmatprep.subr.mxu0 0.0
        %1625 = vmatpush2.xpose.msra.mxu0 0.0
        %1626 = vmatprep.subr.mxu0 0.0
        %1627 = vmatpush2.xpose.msra.mxu0 0.0
        %1628 = vmatprep.subr.mxu0 0.0
        %1629 = vmatpush2.xpose.msra.mxu0 0.0
        %1630 = vmatprep.subr.mxu0 0.0
        %1631 = vmatpush2.xpose.msra.mxu0 0.0
        %1632 = vmatprep.subr.mxu0 0.0
        %1633 = vmatpush2.xpose.msra.mxu0 0.0
        %1634 = vmatprep.subr.mxu0 0.0
        %1635 = vmatpush2.xpose.msra.mxu0 0.0
        %1636 = vmatprep.subr.mxu0 0.0
        %1637 = vmatpush2.xpose.msra.mxu0 0.0
        %1638 = vmatprep.subr.mxu0 0.0
        %1639 = vmatpush2.xpose.msra.mxu0 0.0
        %1640 = vmatprep.subr.mxu0 0.0
        %1641 = vmatpush2.xpose.msra.mxu0 0.0
        %1642 = vmatprep.subr.mxu0 0.0
        %1643 = vmatpush2.xpose.msra.mxu0 0.0
        %1644 = vmatprep.subr.mxu0 0.0
        %1645 = vmatpush2.xpose.msra.mxu0 0.0
        %1646 = vmatprep.subr.mxu0 0.0
        %1647 = vmatpush2.xpose.msra.mxu0 0.0
        %1648 = vmatprep.mubr.f32.mxu0 0.0
        %1649 = vmatmul.mubr.f32.gmra.mxu0 %v1579
        %v1650 = vpop.f32.mrf.mxu0
        %v1651 = vadd.f32 %v307, %v1650
        %v1652 = vpop.f32.mrf.mxu0
        %1653 = vdwg.mxu0
        %v1654 = vsel %vm518, %v1651, -inf
        %1655 = vmax.xlane.f32.xlu0 %v1654
        %v1656 = vpop.xlane.xlu0 %1655
        %v1657 = vsub.f32 %v1651, %v1656
        %v1658 = vmul.f32 %v1657, 1.442695
        %v1659 = vpow.pop %v1658
        %v1660 = vsel %vm518, %v1659, 0.0
        %1661 = vadd.xlane.f32.xlu0 %v1660
        %v1662 = vpop.xlane.xlu0 %1661
        %v1663 = vrcp.pop %v1662
        %v1664 = vmul.f32 %v1659, %v1663
        %1666 = vrot.lane.b32.xlu0 %v1577, 80
        %v1667 = vpop.permute.xlu0 %1666
        %v1670 = vsel %vm518, %v1664, 0
        %1672 = vmatprep.subr.mxu0 0.0
        %1673 = vmatpush1.msra.mxu0 0.0
        %1674 = vmatprep.subr.mxu0 0.0
        %1675 = vmatpush1.msra.mxu0 0.0
        %1676 = vmatprep.subr.mxu0 0.0
        %1677 = vmatpush1.msra.mxu0 0.0
        %1678 = vmatprep.subr.mxu0 0.0
        %1679 = vmatpush1.msra.mxu0 0.0
        %1680 = vmatprep.subr.mxu0 0.0
        %1681 = vmatpush1.msra.mxu0 0.0
        %1682 = vmatprep.subr.mxu0 0.0
        %1683 = vmatpush1.msra.mxu0 0.0
        %1684 = vmatprep.subr.mxu0 0.0
        %1685 = vmatpush1.msra.mxu0 0.0
        %1686 = vmatprep.subr.mxu0 0.0
        %1687 = vmatpush1.msra.mxu0 0.0
        %1688 = vmatprep.subr.mxu0 0.0
        %1689 = vmatpush1.msra.mxu0 0.0
        %1690 = vmatprep.subr.mxu0 0.0
        %1691 = vmatpush1.msra.mxu0 0.0
        %1692 = vmatprep.subr.mxu0 0.0
        %1693 = vmatpush1.msra.mxu0 0.0
        %1694 = vmatprep.subr.mxu0 0.0
        %1695 = vmatpush1.msra.mxu0 0.0
        %1696 = vmatprep.subr.mxu0 0.0
        %1697 = vmatpush1.msra.mxu0 0.0
        %1698 = vmatprep.subr.mxu0 0.0
        %1699 = vmatpush1.msra.mxu0 0.0
        %1700 = vmatprep.subr.mxu0 0.0
        %1701 = vmatpush1.msra.mxu0 0.0
        %1702 = vmatprep.subr.mxu0 0.0
        %1703 = vmatpush1.msra.mxu0 %v1667
        %1704 = vmatprep.subr.mxu0 0.0
        %1705 = vmatpush2.msra.mxu0 0.0
        %1706 = vmatprep.subr.mxu0 0.0
        %1707 = vmatpush2.msra.mxu0 0.0
        %1708 = vmatprep.subr.mxu0 0.0
        %1709 = vmatpush2.msra.mxu0 0.0
        %1710 = vmatprep.subr.mxu0 0.0
        %1711 = vmatpush2.msra.mxu0 0.0
        %1712 = vmatprep.subr.mxu0 0.0
        %1713 = vmatpush2.msra.mxu0 0.0
        %1714 = vmatprep.subr.mxu0 0.0
        %1715 = vmatpush2.msra.mxu0 0.0
        %1716 = vmatprep.subr.mxu0 0.0
        %1717 = vmatpush2.msra.mxu0 0.0
        %1718 = vmatprep.subr.mxu0 0.0
        %1719 = vmatpush2.msra.mxu0 0.0
        %1720 = vmatprep.subr.mxu0 0.0
        %1721 = vmatpush2.msra.mxu0 0.0
        %1722 = vmatprep.subr.mxu0 0.0
        %1723 = vmatpush2.msra.mxu0 0.0
        %1724 = vmatprep.subr.mxu0 0.0
        %1725 = vmatpush2.msra.mxu0 0.0
        %1726 = vmatprep.subr.mxu0 0.0
        %1727 = vmatpush2.msra.mxu0 0.0
        %1728 = vmatprep.subr.mxu0 0.0
        %1729 = vmatpush2.msra.mxu0 0.0
        %1730 = vmatprep.subr.mxu0 0.0
        %1731 = vmatpush2.msra.mxu0 0.0
        %1732 = vmatprep.subr.mxu0 0.0
        %1733 = vmatpush2.msra.mxu0 0.0
        %1734 = vmatprep.subr.mxu0 0.0
        %1735 = vmatpush2.msra.mxu0 0.0
        %1736 = vmatprep.mubr.f32.mxu0 0.0
        %1737 = vmatmul.mubr.f32.gmra.mxu0 %v1670
        %v1738 = vpop.f32.mrf.mxu0
        %v1739 = vadd.f32 0.0, %v1738
        %v1740 = vpop.f32.mrf.mxu0
        %1741 = vdwg.mxu0
        %1743 = vrot.lane.b32.xlu0 %v1033, 8
        %v1744 = vpop.permute.xlu0 %1743
        %1747 = vrot.lane.b32.xlu0 %v1386, 16
        %v1748 = vpop.permute.xlu0 %1747
        %1751 = vrot.lane.b32.xlu0 %v1739, 24
        %v1752 = vpop.permute.xlu0 %1751
        %v1754 = vsel %vm518, %v680, %v1744
        %vm1755 = vcmask 130048
        %v1756 = vsel %vm1755, %v1754, %v1748
        %vm1757 = vcmask 195584
        %v1758 = vsel %vm1757, %v1756, %v1752
        %v1759 = vadd.f32 %v221, %v1758
        %v1760 = vmul.f32 %v1759, %v1759
        %v1761 = vsel %vm223, %v1760, 0.0
        %1762 = vadd.xlane.f32.xlu0 %v1761
        %v1763 = vpop.xlane.xlu0 %1762
        %v1764 = vmul.f32 %v1763, %v227
        %v1765 = vadd.f32 %v1764, 1.1920929e-07
        %v1766 = vrsqrt.pop %v1765
        %v1767 = vmul.f32 %v1759, %v1766
        %v1768 = vpack.c.bf16 %v1767, %v1767
        %v1769 = vld [vmem:[%s3] sm:$0xff]
        %v1770 = vld [vmem:[%s3 + $0x8] sm:$0xff]
        %v1771 = vld [vmem:[%s3 + $0x10] sm:$0xff]
        %v1772 = vld [vmem:[%s3 + $0x18] sm:$0xff]
        %v1773 = vld [vmem:[%s3 + $0x20] sm:$0xff]
        %v1774 = vld [vmem:[%s3 + $0x28] sm:$0xff]
        %v1775 = vld [vmem:[%s3 + $0x30] sm:$0xff]
        %v1776 = vld [vmem:[%s3 + $0x38] sm:$0xff]
        %v1785 = vunpack.c.l.b16 %v1769
        %v1786 = vunpack.c.h.b16 %v1769
        %v1787 = vunpack.c.l.b16 %v1770
        %v1788 = vunpack.c.h.b16 %v1770
        %v1789 = vunpack.c.l.b16 %v1771
        %v1790 = vunpack.c.h.b16 %v1771
        %v1791 = vunpack.c.l.b16 %v1772
        %v1792 = vunpack.c.h.b16 %v1772
        %v1793 = vunpack.c.l.b16 %v1773
        %v1794 = vunpack.c.h.b16 %v1773
        %v1795 = vunpack.c.l.b16 %v1774
        %v1796 = vunpack.c.h.b16 %v1774
        %v1797 = vunpack.c.l.b16 %v1775
        %v1798 = vunpack.c.h.b16 %v1775
        %v1799 = vunpack.c.l.b16 %v1776
        %v1800 = vunpack.c.h.b16 %v1776
        %v1801 = vpack.c.b16 %v1789, %v1785
        %v1802 = vpack.c.b16 %v1790, %v1786
        %v1803 = vpack.c.b16 %v1791, %v1787
        %v1804 = vpack.c.b16 %v1792, %v1788
        %v1805 = vpack.c.b16 %v1797, %v1793
        %v1806 = vpack.c.b16 %v1798, %v1794
        %v1807 = vpack.c.b16 %v1799, %v1795
        %v1808 = vpack.c.b16 %v1800, %v1796
        %v1818 = vsel %vm223, %v1768, 0
        %1820 = vmatprep.subr.bf16.mxu0 0
        %1821 = vmatpush1.bf16.msra.mxu0 0
        %1822 = vmatprep.subr.bf16.mxu0 0
        %1823 = vmatpush1.bf16.msra.mxu0 0
        %1824 = vmatprep.subr.bf16.mxu0 0
        %1825 = vmatpush1.bf16.msra.mxu0 0
        %1826 = vmatprep.subr.bf16.mxu0 0
        %1827 = vmatpush1.bf16.msra.mxu0 0
        %1828 = vmatprep.subr.bf16.mxu0 0
        %1829 = vmatpush1.bf16.msra.mxu0 0
        %1830 = vmatprep.subr.bf16.mxu0 0
        %1831 = vmatpush1.bf16.msra.mxu0 0
        %1832 = vmatprep.subr.bf16.mxu0 %v1806
        %1833 = vmatpush1.bf16.msra.mxu0 %v1805
        %1834 = vmatprep.subr.bf16.mxu0 %v1802
        %1835 = vmatpush1.bf16.msra.mxu0 %v1801
        %1836 = vmatprep.subr.bf16.mxu0 0
        %1837 = vmatpush2.bf16.msra.mxu0 0
        %1838 = vmatprep.subr.bf16.mxu0 0
        %1839 = vmatpush2.bf16.msra.mxu0 0
        %1840 = vmatprep.subr.bf16.mxu0 0
        %1841 = vmatpush2.bf16.msra.mxu0 0
        %1842 = vmatprep.subr.bf16.mxu0 0
        %1843 = vmatpush2.bf16.msra.mxu0 0
        %1844 = vmatprep.subr.bf16.mxu0 0
        %1845 = vmatpush2.bf16.msra.mxu0 0
        %1846 = vmatprep.subr.bf16.mxu0 0
        %1847 = vmatpush2.bf16.msra.mxu0 0
        %1848 = vmatprep.subr.bf16.mxu0 0
        %1849 = vmatpush2.bf16.msra.mxu0 0
        %1850 = vmatprep.subr.bf16.mxu0 0
        %1851 = vmatpush2.bf16.msra.mxu0 0
        %1852 = vmatprep.mubr.bf16.mxu0 0
        %1853 = vmatmul.mubr.bf16.gmra.mxu0 %v1818
        %v1854 = vpop.f32.mrf.mxu0
        %v1855 = vadd.f32 0.0, %v1854
        %v1856 = vpop.f32.mrf.mxu0
        %v1857 = vadd.f32 0.0, %v1856
        %v1858 = vpop.f32.mrf.mxu0
        %v1859 = vpop.f32.mrf.mxu0
        %1860 = vdwg.mxu0
        %1861 = vmatprep.subr.bf16.mxu0 0
        %1862 = vmatpush1.bf16.msra.mxu0 0
        %1863 = vmatprep.subr.bf16.mxu0 0
        %1864 = vmatpush1.bf16.msra.mxu0 0
        %1865 = vmatprep.subr.bf16.mxu0 0
        %1866 = vmatpush1.bf16.msra.mxu0 0
        %1867 = vmatprep.subr.bf16.mxu0 0
        %1868 = vmatpush1.bf16.msra.mxu0 0
        %1869 = vmatprep.subr.bf16.mxu0 0
        %1870 = vmatpush1.bf16.msra.mxu0 0
        %1871 = vmatprep.subr.bf16.mxu0 0
        %1872 = vmatpush1.bf16.msra.mxu0 0
        %1873 = vmatprep.subr.bf16.mxu0 %v1808
        %1874 = vmatpush1.bf16.msra.mxu0 %v1807
        %1875 = vmatprep.subr.bf16.mxu0 %v1804
        %1876 = vmatpush1.bf16.msra.mxu0 %v1803
        %1877 = vmatprep.subr.bf16.mxu0 0
        %1878 = vmatpush2.bf16.msra.mxu0 0
        %1879 = vmatprep.subr.bf16.mxu0 0
        %1880 = vmatpush2.bf16.msra.mxu0 0
        %1881 = vmatprep.subr.bf16.mxu0 0
        %1882 = vmatpush2.bf16.msra.mxu0 0
        %1883 = vmatprep.subr.bf16.mxu0 0
        %1884 = vmatpush2.bf16.msra.mxu0 0
        %1885 = vmatprep.subr.bf16.mxu0 0
        %1886 = vmatpush2.bf16.msra.mxu0 0
        %1887 = vmatprep.subr.bf16.mxu0 0
        %1888 = vmatpush2.bf16.msra.mxu0 0
        %1889 = vmatprep.subr.bf16.mxu0 0
        %1890 = vmatpush2.bf16.msra.mxu0 0
        %1891 = vmatprep.subr.bf16.mxu0 0
        %1892 = vmatpush2.bf16.msra.mxu0 0
        %1893 = vmatprep.mubr.bf16.mxu0 0
        %1894 = vmatmul.mubr.bf16.gmra.mxu0 %v1818
        %v1895 = vpop.f32.mrf.mxu0
        %v1896 = vadd.f32 0.0, %v1895
        %v1897 = vpop.f32.mrf.mxu0
        %v1898 = vadd.f32 0.0, %v1897
        %v1899 = vpop.f32.mrf.mxu0
        %v1900 = vpop.f32.mrf.mxu0
        %1901 = vdwg.mxu0
        %v1902 = vsub.f32 0.0, %v1855
        %v1903 = vsub.f32 0.0, %v1857
        %v1904 = vmul.f32 %v1902, 1.442695
        %v1905 = vpow.pop %v1904
        %v1906 = vmul.f32 %v1903, 1.442695
        %v1907 = vpow.pop %v1906
        %v1908 = vadd.f32 %v1905, 1.0
        %v1909 = vadd.f32 %v1907, 1.0
        %v1910 = vrcp.pop %v1908
        %v1911 = vmul.f32 1.0, %v1910
        %v1912 = vrcp.pop %v1909
        %v1913 = vmul.f32 1.0, %v1912
        %v1914 = vmul.f32 %v1855, %v1911
        %v1915 = vmul.f32 %v1857, %v1913
        %v1916 = vmul.f32 %v1914, %v1896
        %v1917 = vmul.f32 %v1915, %v1898
        %v1918 = vpack.c.bf16 %v1916, %v1916
        %v1919 = vpack.c.bf16 %v1917, %v1917
        %v1920 = vld [vmem:[%s4] sm:$0xf]
        %v1921 = vld [vmem:[%s4 + $0x4] sm:$0xf]
        %v1922 = vld [vmem:[%s4 + $0x8] sm:$0xf]
        %v1923 = vld [vmem:[%s4 + $0xc] sm:$0xf]
        %v1924 = vld [vmem:[%s4 + $0x10] sm:$0xf]
        %v1925 = vld [vmem:[%s4 + $0x14] sm:$0xf]
        %v1926 = vld [vmem:[%s4 + $0x18] sm:$0xf]
        %v1927 = vld [vmem:[%s4 + $0x1c] sm:$0xf]
        %v1928 = vld [vmem:[%s4 + $0x20] sm:$0xf]
        %v1929 = vld [vmem:[%s4 + $0x24] sm:$0xf]
        %v1930 = vld [vmem:[%s4 + $0x28] sm:$0xf]
        %v1931 = vld [vmem:[%s4 + $0x2c] sm:$0xf]
        %v1932 = vld [vmem:[%s4 + $0x30] sm:$0xf]
        %v1933 = vld [vmem:[%s4 + $0x34] sm:$0xf]
        %v1934 = vld [vmem:[%s4 + $0x38] sm:$0xf]
        %v1935 = vld [vmem:[%s4 + $0x3c] sm:$0xf]
        %v1936 = vld [vmem:[%s4 + $0x40] sm:$0xf]
        %v1937 = vld [vmem:[%s4 + $0x44] sm:$0xf]
        %v1938 = vld [vmem:[%s4 + $0x48] sm:$0xf]
        %v1939 = vld [vmem:[%s4 + $0x4c] sm:$0xf]
        %v1940 = vld [vmem:[%s4 + $0x50] sm:$0xf]
        %v1941 = vld [vmem:[%s4 + $0x54] sm:$0xf]
        %v1942 = vld [vmem:[%s4 + $0x58] sm:$0xf]
        %v1943 = vld [vmem:[%s4 + $0x5c] sm:$0xf]
        %v1944 = vld [vmem:[%s4 + $0x60] sm:$0xf]
        %v1945 = vld [vmem:[%s4 + $0x64] sm:$0xf]
        %v1946 = vld [vmem:[%s4 + $0x68] sm:$0xf]
        %v1947 = vld [vmem:[%s4 + $0x6c] sm:$0xf]
        %v1948 = vld [vmem:[%s4 + $0x70] sm:$0xf]
        %v1949 = vld [vmem:[%s4 + $0x74] sm:$0xf]
        %v1950 = vld [vmem:[%s4 + $0x78] sm:$0xf]
        %v1951 = vld [vmem:[%s4 + $0x7c] sm:$0xf]
        %v1984 = vunpack.c.l.b16 %v1920
        %v1985 = vunpack.c.l.b16 %v1921
        %v1986 = vunpack.c.l.b16 %v1922
        %v1987 = vunpack.c.l.b16 %v1923
        %v1988 = vunpack.c.l.b16 %v1924
        %v1989 = vunpack.c.l.b16 %v1925
        %v1990 = vunpack.c.l.b16 %v1926
        %v1991 = vunpack.c.l.b16 %v1927
        %v1992 = vunpack.c.l.b16 %v1928
        %v1993 = vunpack.c.l.b16 %v1929
        %v1994 = vunpack.c.l.b16 %v1930
        %v1995 = vunpack.c.l.b16 %v1931
        %v1996 = vunpack.c.l.b16 %v1932
        %v1997 = vunpack.c.l.b16 %v1933
        %v1998 = vunpack.c.l.b16 %v1934
        %v1999 = vunpack.c.l.b16 %v1935
        %v2000 = vunpack.c.l.b16 %v1936
        %v2001 = vunpack.c.l.b16 %v1937
        %v2002 = vunpack.c.l.b16 %v1938
        %v2003 = vunpack.c.l.b16 %v1939
        %v2004 = vunpack.c.l.b16 %v1940
        %v2005 = vunpack.c.l.b16 %v1941
        %v2006 = vunpack.c.l.b16 %v1942
        %v2007 = vunpack.c.l.b16 %v1943
        %v2008 = vunpack.c.l.b16 %v1944
        %v2009 = vunpack.c.l.b16 %v1945
        %v2010 = vunpack.c.l.b16 %v1946
        %v2011 = vunpack.c.l.b16 %v1947
        %v2012 = vunpack.c.l.b16 %v1948
        %v2013 = vunpack.c.l.b16 %v1949
        %v2014 = vunpack.c.l.b16 %v1950
        %v2015 = vunpack.c.l.b16 %v1951
        %v2016 = vpack.c.b16 %v1985, %v1984
        %v2017 = vpack.c.b16 %v1987, %v1986
        %v2018 = vpack.c.b16 %v1989, %v1988
        %v2019 = vpack.c.b16 %v1991, %v1990
        %v2020 = vpack.c.b16 %v1993, %v1992
        %v2021 = vpack.c.b16 %v1995, %v1994
        %v2022 = vpack.c.b16 %v1997, %v1996
        %v2023 = vpack.c.b16 %v1999, %v1998
        %v2024 = vpack.c.b16 %v2001, %v2000
        %v2025 = vpack.c.b16 %v2003, %v2002
        %v2026 = vpack.c.b16 %v2005, %v2004
        %v2027 = vpack.c.b16 %v2007, %v2006
        %v2028 = vpack.c.b16 %v2009, %v2008
        %v2029 = vpack.c.b16 %v2011, %v2010
        %v2030 = vpack.c.b16 %v2013, %v2012
        %v2031 = vpack.c.b16 %v2015, %v2014
        %2048 = vmatprep.subr.bf16.mxu0 0
        %2049 = vmatpush1.bf16.msra.mxu0 %v2023
        %2050 = vmatprep.subr.bf16.mxu0 0
        %2051 = vmatpush1.bf16.msra.mxu0 %v2022
        %2052 = vmatprep.subr.bf16.mxu0 0
        %2053 = vmatpush1.bf16.msra.mxu0 %v2021
        %2054 = vmatprep.subr.bf16.mxu0 0
        %2055 = vmatpush1.bf16.msra.mxu0 %v2020
        %2056 = vmatprep.subr.bf16.mxu0 0
        %2057 = vmatpush1.bf16.msra.mxu0 %v2019
        %2058 = vmatprep.subr.bf16.mxu0 0
        %2059 = vmatpush1.bf16.msra.mxu0 %v2018
        %2060 = vmatprep.subr.bf16.mxu0 0
        %2061 = vmatpush1.bf16.msra.mxu0 %v2017
        %2062 = vmatprep.subr.bf16.mxu0 0
        %2063 = vmatpush1.bf16.msra.mxu0 %v2016
        %2064 = vmatprep.subr.bf16.mxu0 0
        %2065 = vmatpush2.bf16.msra.mxu0 %v2031
        %2066 = vmatprep.subr.bf16.mxu0 0
        %2067 = vmatpush2.bf16.msra.mxu0 %v2030
        %2068 = vmatprep.subr.bf16.mxu0 0
        %2069 = vmatpush2.bf16.msra.mxu0 %v2029
        %2070 = vmatprep.subr.bf16.mxu0 0
        %2071 = vmatpush2.bf16.msra.mxu0 %v2028
        %2072 = vmatprep.subr.bf16.mxu0 0
        %2073 = vmatpush2.bf16.msra.mxu0 %v2027
        %2074 = vmatprep.subr.bf16.mxu0 0
        %2075 = vmatpush2.bf16.msra.mxu0 %v2026
        %2076 = vmatprep.subr.bf16.mxu0 0
        %2077 = vmatpush2.bf16.msra.mxu0 %v2025
        %2078 = vmatprep.subr.bf16.mxu0 0
        %2079 = vmatpush2.bf16.msra.mxu0 %v2024
        %2080 = vmatprep.mubr.bf16.mxu0 %v1919
        %2081 = vmatmul.mubr.bf16.gmra.mxu0 %v1918
        %v2082 = vpop.f32.mrf.mxu0
        %v2083 = vadd.f32 0.0, %v2082
        %v2084 = vpop.f32.mrf.mxu0
        %v2085 = vpop.f32.mrf.mxu0
        %v2086 = vpop.f32.mrf.mxu0
        %2087 = vdwg.mxu0
        %v2088 = vadd.f32 %v1759, %v2083
        %2089 = vst.msk [vmem:[%s215] sm:$0xff] %vm223, %v2088
        %s2090 = sand.u32 %s137, 1
        %s2091 = scalar_lea.sflag [#allocation3], %s2090
        %s2092 = sand.u32 %s137, 1
        %s2093 = smul.addr %s2092, 8
        %s2094 = scalar_lea.vmem [#allocation2], %s2093
        // Predicated region
        $region41: #{tpu_custom_call.1} parent=39 // pred_check
          %p2095 = pneg %p147
        $region42: #{tpu_custom_call.1} parent=39 // pred_check_branch
          %2097 = sbr.rel (%p2095) target = $region44
        $region43: #{tpu_custom_call.1} parent=39 // pred_region
          %s2099 = ssub.s32 128, 128
          %2100 = vsyncadd %s2091, %s2099
          %s2101 = smul.addr %s19, 128
          %s2102 = scalar_lea.hbm %s5, %s2101
          %s2104 = sshll.u32 %s2094, 4
          %s2105 = int_to_ptr.vmem [resolvable:$true] %s2104
          %2107 = dma.vmem_to_hbm [thread:$0]  %s2105, 128, %s2102, %s2091
        $region44: #{tpu_custom_call.1} parent=39 // pred_fallthru
          _
      $region40: #{tpu_custom_call.1} parent=5 // pred_fallthru
        _
      %p2108 = scmp.le.s32.totalorder 2, %s14
      // Predicated region
      $region45: #{tpu_custom_call.1} parent=5 // pred_check
        %p2109 = pneg %p2108
      $region46: #{tpu_custom_call.1} parent=5 // pred_check_branch
        %2111 = sbr.rel (%p2109) target = $region48
      $region47: #{tpu_custom_call.1} parent=5 // pred_region
        %s2112 = ssub.s32 %s14, 2
        // Predicated region
        $region49: #{tpu_custom_call.1} parent=47 // pred_check
          %p2113 = pneg %p153
        $region50: #{tpu_custom_call.1} parent=47 // pred_check_branch
          %2115 = sbr.rel (%p2113) target = $region52
        $region51: #{tpu_custom_call.1} parent=47 // pred_region
          %s2116 = sand.u32 %s138, 1
          %s2117 = scalar_lea.sflag [#allocation3], %s2116
          %s2118 = sand.u32 %s138, 1
          %s2119 = smul.addr %s2118, 8
          %s2120 = scalar_lea.vmem [#allocation2], %s2119
          %2121 = dma.done %s2117, 128
        $region52: #{tpu_custom_call.1} parent=47 // pred_fallthru
          _
      $region48: #{tpu_custom_call.1} parent=5 // pred_fallthru
        _
    $region6: #{tpu_custom_call.1} parent=1 // loop_footer
      %s18 = sadd.s32 1, %s14
    $region7: #{tpu_custom_call.1} parent=1 // loop_footer_branch
      %13 = sbr.rel target = $region3
    $region8: #{tpu_custom_call.1} parent=1 // loop_exit
      _
    %2122 = vsyncpa [#allocation3], 1
    %s2123 = scalar_lea.sflag [#allocation3], 1
    %2124 = vsyncpa %s2123, 1

</llo_original>
